<compile_context>
chip_gen: v5e
topology: v5e:2x2
jax: 0.10.0
libtpu: 0.0.40
codegen_flags: <defaults>
</compile_context>

<pallas_src>
import functools

import jax
import jax.numpy as jnp
import numpy as np
from jax import lax
from jax.experimental import pallas as pl
from jax.experimental.pallas import tpu as pltpu

BN_EPS = 1e-5


# ---------------------------------------------------------------------------
# Fused kernel: phase 0 = attention (+ out-proj) per tile, y kept in VMEM;
#               phase 1 = BN batch-stats (once) + affine + ReLU + store.
# ---------------------------------------------------------------------------
def fsa_fused_kernel(x_ref, w_in_ref, b_in_ref, wo_ref, bo_ref,
                     gamma_ref, beta_ref,
                     out_ref,
                     y_vmem, scale_ref, shift_ref,
                     *, num_heads, seq_len, count):
    phase = pl.program_id(0)      # 0: attention, 1: BN apply
    tile = pl.program_id(1)

    @pl.when(phase == 0)
    def _attention():
        x = x_ref[...].astype(jnp.float32)                     # (tnf, C)
        tnf, c = x.shape
        tn = tnf // seq_len
        dh = c // num_heads
        sm_scale = 1.0 / np.sqrt(float(dh))

        # Fused in-projection: q | k | v in one MXU matmul.
        qkv = jnp.dot(x, w_in_ref[...],
                      preferred_element_type=jnp.float32) + b_in_ref[...]  # (tnf, 3C)

        # Heads are tiny (dh=4) and statically unrolled.  Per head we fold the
        # matching slice of W_o and accumulate the TRANSPOSED result
        # (C, tnf): no concatenation of 4-lane slices and the final layout is
        # lane-dense for the BN reductions / store.
        y_t = None
        for h in range(num_heads):
            lo, hi = h * dh, (h + 1) * dh
            q = qkv[:, lo:hi].reshape(tn, seq_len, dh)
            k = qkv[:, c + lo:c + hi].reshape(tn, seq_len, dh)
            v = qkv[:, 2 * c + lo:2 * c + hi].reshape(tn, seq_len, dh)

            s = jnp.einsum('nqd,nkd->nqk', q, k,
                           preferred_element_type=jnp.float32) * sm_scale
            s = s - jnp.max(s, axis=-1, keepdims=True)
            p = jnp.exp(s)
            p = p / jnp.sum(p, axis=-1, keepdims=True)          # exact softmax
            o = jnp.einsum('nqk,nkd->nqd', p, v,
                           preferred_element_type=jnp.float32)  # (tn, F, dh)
            o2 = o.reshape(tnf, dh)

            # (C, dh) x (tnf, dh)^T -> (C, tnf): out-projection, transposed.
            term = jnp.einsum('cd,rd->cr', wo_ref[:, lo:hi], o2,
                              preferred_element_type=jnp.float32)
            y_t = term if y_t is None else y_t + term

        y_vmem[tile] = y_t + bo_ref[...]                        # (C, tnf)

    @pl.when(jnp.logical_and(phase == 1, tile == 0))
    def _bn_stats():
        # Exact two-pass (centered) batch statistics over the resident f32 y.
        yall = y_vmem[...]                                      # (nt, C, tnf)
        inv_count = 1.0 / count
        s1 = jnp.sum(jnp.sum(yall, axis=0), axis=1, keepdims=True)   # (C, 1)
        mean = s1 * inv_count
        d = yall - mean[None]
        s2 = jnp.sum(jnp.sum(d * d, axis=0), axis=1, keepdims=True)  # (C, 1)
        var = s2 * inv_count
        inv = lax.rsqrt(var + BN_EPS)
        sc = gamma_ref[...] * inv                                # (C, 1)
        scale_ref[...] = sc
        shift_ref[...] = beta_ref[...] - mean * sc

    @pl.when(phase == 1)
    def _apply():
        y = y_vmem[tile]                                        # (C, tnf)
        out = jnp.maximum(y * scale_ref[...] + shift_ref[...], 0.0)
        out_ref[...] = out.astype(out_ref.dtype)                # 128-lane store


# ---------------------------------------------------------------------------
# Wrapper
# ---------------------------------------------------------------------------
def fsa_block(x, params, num_heads, block_n=None):
    """x: (B, C, T, F) NCHW float32 -> (B, C, T, F)."""
    B, C, T, Fd = x.shape
    assert C % num_heads == 0
    N = B * T
    if block_n is None:
        block_n = N                       # process all sequences in one tile
    assert N % block_n == 0
    num_tiles = N // block_n
    tnf = block_n * Fd
    assert num_tiles == 1 or tnf % 128 == 0, "tile width must be lane-aligned"

    # (B,C,T,F) -> (N*F, C): row n*F + f (n = b*T + t), channels on lanes.
    x_flat = jnp.transpose(x, (0, 2, 3, 1)).reshape(N * Fd, C)

    # Weight prep (free, host/XLA side).
    w_in_t = jnp.concatenate(
        [params['wq'], params['wk'], params['wv']], axis=0).T          # (C, 3C)
    b_in = jnp.concatenate(
        [params['bq'], params['bk'], params['bv']]).reshape(1, 3 * C)  # (1, 3C)
    wo = params['wo']                                                  # (C, C)
    bo = params['bo'].reshape(C, 1)
    gamma = params['gamma'].reshape(C, 1)
    beta = params['beta'].reshape(C, 1)

    count = float(N * Fd)

    # Advisory cost estimate for XLA scheduling around the custom call.
    dh = C // num_heads
    flops = (2 * N * Fd * C * 3 * C
             + 2 * 2 * N * num_heads * Fd * Fd * dh
             + 2 * N * Fd * C * C
             + 10 * N * Fd * C)
    transcendentals = N * num_heads * Fd * Fd
    bytes_accessed = 4 * (2 * N * Fd * C + C * 3 * C + 3 * C + C * C + 3 * C)

    out_cnf = pl.pallas_call(
        functools.partial(fsa_fused_kernel, num_heads=num_heads,
                          seq_len=Fd, count=count),
        grid=(2, num_tiles),                                    # (phase, tile)
        in_specs=[
            pl.BlockSpec((tnf, C), lambda p, i: (i, 0)),        # x tile
            pl.BlockSpec((C, 3 * C), lambda p, i: (0, 0)),      # fused in-proj W^T
            pl.BlockSpec((1, 3 * C), lambda p, i: (0, 0)),      # fused in-proj bias
            pl.BlockSpec((C, C), lambda p, i: (0, 0)),          # out-proj W
            pl.BlockSpec((C, 1), lambda p, i: (0, 0)),          # out-proj bias
            pl.BlockSpec((C, 1), lambda p, i: (0, 0)),          # BN gamma
            pl.BlockSpec((C, 1), lambda p, i: (0, 0)),          # BN beta
        ],
        out_specs=pl.BlockSpec((C, tnf), lambda p, i: (0, i)),  # lane-dense
        out_shape=jax.ShapeDtypeStruct((C, N * Fd), x.dtype),
        scratch_shapes=[
            pltpu.VMEM((num_tiles, C, tnf), jnp.float32),       # resident y^T
            pltpu.VMEM((C, 1), jnp.float32),                    # BN scale
            pltpu.VMEM((C, 1), jnp.float32),                    # BN shift
        ],
        compiler_params=pltpu.CompilerParams(
            # Phase 0 must fully precede phase 1 (stats need the whole y) and
            # the stats/scale scratch is cross-tile state, so both axes are
            # sequential on one core.
            dimension_semantics=("arbitrary", "arbitrary"),
            vmem_limit_bytes=32 * 1024 * 1024,                  # safe on v5e/v6e/v7x
        ),
        cost_estimate=pl.CostEstimate(flops=int(flops),
                                      transcendentals=int(transcendentals),
                                      bytes_accessed=int(bytes_accessed)),
    )(x_flat, w_in_t, b_in, wo, bo, gamma, beta)

    # (C, N*F) -> (B, C, T, F).
    out = out_cnf.reshape(C, B, T, Fd)
    return jnp.transpose(out, (1, 0, 2, 3))


# ---------------------------------------------------------------------------
# Pure-JAX reference (mirrors torch semantics) for validation.
# ---------------------------------------------------------------------------
def fsa_block_ref(x, params, num_heads):
    B, C, T, Fd = x.shape
    dh = C // num_heads
    x_ = jnp.transpose(x, (0, 2, 3, 1)).reshape(B * T, Fd, C)
    q = x_ @ params['wq'].T + params['bq']
    k = x_ @ params['wk'].T + params['bk']
    v = x_ @ params['wv'].T + params['bv']

    def split(a):  # (N, F, C) -> (N, H, F, dh)
        return a.reshape(B * T, Fd, num_heads, dh).transpose(0, 2, 1, 3)

    qh, kh, vh = split(q), split(k), split(v)
    s = jnp.einsum('nhqd,nhkd->nhqk', qh, kh) / np.sqrt(float(dh))
    p = jax.nn.softmax(s, axis=-1)
    o = jnp.einsum('nhqk,nhkd->nhqd', p, vh)
    o = o.transpose(0, 2, 1, 3).reshape(B * T, Fd, C)
    y = o @ params['wo'].T + params['bo']
    y = y.reshape(B, T, Fd, C).transpose(0, 3, 1, 2)            # (B, C, T, F)
    mean = jnp.mean(y, axis=(0, 2, 3), keepdims=True)
    var = jnp.mean((y - mean) ** 2, axis=(0, 2, 3), keepdims=True)
    yn = (y - mean) / jnp.sqrt(var + BN_EPS)
    yn = yn * params['gamma'].reshape(1, C, 1, 1) + params['beta'].reshape(1, C, 1, 1)
    return jnp.maximum(yn, 0.0)


def init_params(key, in_channels):
    C = in_channels
    ks = jax.random.split(key, 6)
    in_proj_w = jax.random.normal(ks[0], (3 * C, C), jnp.float32) * 0.1
    in_proj_b = jax.random.normal(ks[1], (3 * C,), jnp.float32) * 0.1
    out_proj_w = jax.random.normal(ks[2], (C, C), jnp.float32) * 0.1
    out_proj_b = jax.random.normal(ks[3], (C,), jnp.float32) * 0.1
    gamma = 1.0 + 0.1 * jax.random.normal(ks[4], (C,), jnp.float32)
    beta = 0.1 * jax.random.normal(ks[5], (C,), jnp.float32)
    return dict(
        wq=in_proj_w[:C], wk=in_proj_w[C:2 * C], wv=in_proj_w[2 * C:],
        bq=in_proj_b[:C], bk=in_proj_b[C:2 * C], bv=in_proj_b[2 * C:],
        wo=out_proj_w, bo=out_proj_b,
        gamma=gamma, beta=beta,
    )


if __name__ == "__main__":
    # FSABlock(in_channels=8, hidden_size=2 heads); N = B*T = 8 sequences of
    # length F = 16, all processed in a single fused tile.
    B, C, T, Fd = 2, 8, 4, 16
    num_heads = 2  # == the hidden_size argument of the module

    key = jax.random.PRNGKey(0)
    kx, kp = jax.random.split(key)
    x = jax.random.normal(kx, (B, C, T, Fd), jnp.float32)
    params = init_params(kp, C)

    out = jax.block_until_ready(fsa_block(x, params, num_heads))
    ref = jax.block_until_ready(fsa_block_ref(x, params, num_heads))

    np.testing.assert_allclose(np.asarray(out), np.asarray(ref),
                               rtol=2e-3, atol=2e-3)
    print("KERNEL_OK")
</pallas_src>

<mosaic_0001>
module attributes {stable_mosaic.version = 11 : i64} {
  func.func @fsa_fused_kernel(%arg0: i32, %arg1: i32, %arg2: memref<128x8xf32, #tpu.memory_space<vmem>>, %arg3: memref<8x24xf32, #tpu.memory_space<vmem>>, %arg4: memref<1x24xf32, #tpu.memory_space<vmem>>, %arg5: memref<8x8xf32, #tpu.memory_space<vmem>>, %arg6: memref<8x1xf32, #tpu.memory_space<vmem>>, %arg7: memref<8x1xf32, #tpu.memory_space<vmem>>, %arg8: memref<8x1xf32, #tpu.memory_space<vmem>>, %arg9: memref<8x128xf32, #tpu.memory_space<vmem>>, %arg10: memref<1x8x128xf32, #tpu.memory_space<vmem>>, %arg11: memref<8x1xf32, #tpu.memory_space<vmem>>, %arg12: memref<8x1xf32, #tpu.memory_space<vmem>>) attributes {dimension_semantics = [#tpu.dimension_semantics<arbitrary>, #tpu.dimension_semantics<arbitrary>], iteration_bounds = array<i64: 2, 1>, scalar_prefetch = 0 : i64, scratch_operands = 3 : i64, tpu.core_type = #tpu.core_type<tc>, window_params = [{transform_indices = @transform_0, window_bounds = array<i64: 128, 8>}, {pipeline_mode = #tpu.pipeline_mode<synchronous>, transform_indices = @transform_1, window_bounds = array<i64: 8, 24>}, {pipeline_mode = #tpu.pipeline_mode<synchronous>, transform_indices = @transform_2, window_bounds = array<i64: 1, 24>}, {pipeline_mode = #tpu.pipeline_mode<synchronous>, transform_indices = @transform_3, window_bounds = array<i64: 8, 8>}, {pipeline_mode = #tpu.pipeline_mode<synchronous>, transform_indices = @transform_4, window_bounds = array<i64: 8, 1>}, {pipeline_mode = #tpu.pipeline_mode<synchronous>, transform_indices = @transform_5, window_bounds = array<i64: 8, 1>}, {pipeline_mode = #tpu.pipeline_mode<synchronous>, transform_indices = @transform_6, window_bounds = array<i64: 8, 1>}, {transform_indices = @transform_7, window_bounds = array<i64: 8, 128>}]} {
    %c0_i32 = arith.constant 0 : i32
    %0 = arith.cmpi eq, %arg0, %c0_i32 : i32
    %1 = arith.extui %0 : i1 to i32
    %c0_i32_0 = arith.constant 0 : i32
    %2 = arith.cmpi ne, %1, %c0_i32_0 : i32
    scf.if %2 {
      %c0 = arith.constant 0 : index
      %c0_5 = arith.constant 0 : index
      %11 = vector.load %arg2[%c0, %c0_5] : memref<128x8xf32, #tpu.memory_space<vmem>>, vector<128x8xf32>
      %c0_6 = arith.constant 0 : index
      %c0_7 = arith.constant 0 : index
      %12 = vector.load %arg3[%c0_6, %c0_7] : memref<8x24xf32, #tpu.memory_space<vmem>>, vector<8x24xf32>
      %cst = arith.constant dense<0.000000e+00> : vector<128x24xf32>
      %13 = tpu.matmul %11, %12, %cst {dimension_numbers = #tpu.dot_dimension_numbers<[1], [0], [0], [1], [0, 0, 1, 1], [], []>} : vector<128x8xf32>, vector<8x24xf32>, vector<128x24xf32> -> vector<128x24xf32>
      %c0_8 = arith.constant 0 : index
      %c0_9 = arith.constant 0 : index
      %14 = vector.load %arg4[%c0_8, %c0_9] : memref<1x24xf32, #tpu.memory_space<vmem>>, vector<1x24xf32>
      %15 = vector.broadcast %14 : vector<1x24xf32> to vector<128x24xf32>
      %16 = arith.addf %13, %15 : vector<128x24xf32>
      %17 = vector.extract_strided_slice %16 {offsets = [0, 0], sizes = [128, 4], strides = [1, 1]} : vector<128x24xf32> to vector<128x4xf32>
      %18 = vector.shape_cast %17 : vector<128x4xf32> to vector<8x16x4xf32>
      %19 = vector.extract_strided_slice %16 {offsets = [0, 8], sizes = [128, 4], strides = [1, 1]} : vector<128x24xf32> to vector<128x4xf32>
      %20 = vector.shape_cast %19 : vector<128x4xf32> to vector<8x16x4xf32>
      %21 = vector.extract_strided_slice %16 {offsets = [0, 16], sizes = [128, 4], strides = [1, 1]} : vector<128x24xf32> to vector<128x4xf32>
      %22 = vector.shape_cast %21 : vector<128x4xf32> to vector<8x16x4xf32>
      "tpu.trace_start"() <{level = 10 : i32, message = "nqd,nkd->nqk"}> : () -> ()
      %cst_10 = arith.constant dense<0.000000e+00> : vector<8x16x16xf32>
      %23 = tpu.matmul %18, %20, %cst_10 {dimension_numbers = #tpu.dot_dimension_numbers<[2], [2], [1], [1], [0, 0, 0, 1, 1, 1], [0], [0]>} : vector<8x16x4xf32>, vector<8x16x4xf32>, vector<8x16x16xf32> -> vector<8x16x16xf32>
      "tpu.trace_stop"() : () -> ()
      %cst_11 = arith.constant 5.000000e-01 : f32
      %24 = vector.broadcast %cst_11 : f32 to vector<8x16x16xf32>
      %25 = arith.mulf %23, %24 : vector<8x16x16xf32>
      %cst_12 = arith.constant dense<0xFF800000> : vector<8x16xf32>
      %26 = vector.multi_reduction <maximumf>, %25, %cst_12 [2] : vector<8x16x16xf32> to vector<8x16xf32>
      %27 = vector.shape_cast %26 : vector<8x16xf32> to vector<8x16x1xf32>
      %28 = vector.broadcast %27 : vector<8x16x1xf32> to vector<8x16x16xf32>
      %29 = arith.subf %25, %28 : vector<8x16x16xf32>
      %30 = math.exp %29 : vector<8x16x16xf32>
      %cst_13 = arith.constant dense<0.000000e+00> : vector<8x16xf32>
      %31 = vector.multi_reduction <add>, %30, %cst_13 [2] : vector<8x16x16xf32> to vector<8x16xf32>
      %32 = vector.shape_cast %31 : vector<8x16xf32> to vector<8x16x1xf32>
      %33 = vector.broadcast %32 : vector<8x16x1xf32> to vector<8x16x16xf32>
      %34 = arith.divf %30, %33 : vector<8x16x16xf32>
      "tpu.trace_start"() <{level = 10 : i32, message = "nqk,nkd->nqd"}> : () -> ()
      %cst_14 = arith.constant dense<0.000000e+00> : vector<8x16x4xf32>
      %35 = tpu.matmul %34, %22, %cst_14 {dimension_numbers = #tpu.dot_dimension_numbers<[2], [1], [1], [2], [0, 0, 0, 1, 1, 2], [0], [0]>} : vector<8x16x16xf32>, vector<8x16x4xf32>, vector<8x16x4xf32> -> vector<8x16x4xf32>
      "tpu.trace_stop"() : () -> ()
      %36 = vector.shape_cast %35 : vector<8x16x4xf32> to vector<128x4xf32>
      %c0_15 = arith.constant 0 : index
      %c0_16 = arith.constant 0 : index
      %37 = vector.load %arg5[%c0_15, %c0_16] : memref<8x8xf32, #tpu.memory_space<vmem>>, vector<8x4xf32>
      "tpu.trace_start"() <{level = 10 : i32, message = "cd,rd->cr"}> : () -> ()
      %cst_17 = arith.constant dense<0.000000e+00> : vector<8x128xf32>
      %38 = tpu.matmul %37, %36, %cst_17 {dimension_numbers = #tpu.dot_dimension_numbers<[1], [1], [0], [0], [0, 0, 1, 0], [], []>} : vector<8x4xf32>, vector<128x4xf32>, vector<8x128xf32> -> vector<8x128xf32>
      "tpu.trace_stop"() : () -> ()
      %39 = vector.extract_strided_slice %16 {offsets = [0, 4], sizes = [128, 4], strides = [1, 1]} : vector<128x24xf32> to vector<128x4xf32>
      %40 = vector.shape_cast %39 : vector<128x4xf32> to vector<8x16x4xf32>
      %41 = vector.extract_strided_slice %16 {offsets = [0, 12], sizes = [128, 4], strides = [1, 1]} : vector<128x24xf32> to vector<128x4xf32>
      %42 = vector.shape_cast %41 : vector<128x4xf32> to vector<8x16x4xf32>
      %43 = vector.extract_strided_slice %16 {offsets = [0, 20], sizes = [128, 4], strides = [1, 1]} : vector<128x24xf32> to vector<128x4xf32>
      %44 = vector.shape_cast %43 : vector<128x4xf32> to vector<8x16x4xf32>
      "tpu.trace_start"() <{level = 10 : i32, message = "nqd,nkd->nqk"}> : () -> ()
      %cst_18 = arith.constant dense<0.000000e+00> : vector<8x16x16xf32>
      %45 = tpu.matmul %40, %42, %cst_18 {dimension_numbers = #tpu.dot_dimension_numbers<[2], [2], [1], [1], [0, 0, 0, 1, 1, 1], [0], [0]>} : vector<8x16x4xf32>, vector<8x16x4xf32>, vector<8x16x16xf32> -> vector<8x16x16xf32>
      "tpu.trace_stop"() : () -> ()
      %cst_19 = arith.constant 5.000000e-01 : f32
      %46 = vector.broadcast %cst_19 : f32 to vector<8x16x16xf32>
      %47 = arith.mulf %45, %46 : vector<8x16x16xf32>
      %cst_20 = arith.constant dense<0xFF800000> : vector<8x16xf32>
      %48 = vector.multi_reduction <maximumf>, %47, %cst_20 [2] : vector<8x16x16xf32> to vector<8x16xf32>
      %49 = vector.shape_cast %48 : vector<8x16xf32> to vector<8x16x1xf32>
      %50 = vector.broadcast %49 : vector<8x16x1xf32> to vector<8x16x16xf32>
      %51 = arith.subf %47, %50 : vector<8x16x16xf32>
      %52 = math.exp %51 : vector<8x16x16xf32>
      %cst_21 = arith.constant dense<0.000000e+00> : vector<8x16xf32>
      %53 = vector.multi_reduction <add>, %52, %cst_21 [2] : vector<8x16x16xf32> to vector<8x16xf32>
      %54 = vector.shape_cast %53 : vector<8x16xf32> to vector<8x16x1xf32>
      %55 = vector.broadcast %54 : vector<8x16x1xf32> to vector<8x16x16xf32>
      %56 = arith.divf %52, %55 : vector<8x16x16xf32>
      "tpu.trace_start"() <{level = 10 : i32, message = "nqk,nkd->nqd"}> : () -> ()
      %cst_22 = arith.constant dense<0.000000e+00> : vector<8x16x4xf32>
      %57 = tpu.matmul %56, %44, %cst_22 {dimension_numbers = #tpu.dot_dimension_numbers<[2], [1], [1], [2], [0, 0, 0, 1, 1, 2], [0], [0]>} : vector<8x16x16xf32>, vector<8x16x4xf32>, vector<8x16x4xf32> -> vector<8x16x4xf32>
      "tpu.trace_stop"() : () -> ()
      %58 = vector.shape_cast %57 : vector<8x16x4xf32> to vector<128x4xf32>
      %c0_23 = arith.constant 0 : index
      %c4 = arith.constant 4 : index
      %59 = vector.load %arg5[%c0_23, %c4] : memref<8x8xf32, #tpu.memory_space<vmem>>, vector<8x4xf32>
      "tpu.trace_start"() <{level = 10 : i32, message = "cd,rd->cr"}> : () -> ()
      %cst_24 = arith.constant dense<0.000000e+00> : vector<8x128xf32>
      %60 = tpu.matmul %59, %58, %cst_24 {dimension_numbers = #tpu.dot_dimension_numbers<[1], [1], [0], [0], [0, 0, 1, 0], [], []>} : vector<8x4xf32>, vector<128x4xf32>, vector<8x128xf32> -> vector<8x128xf32>
      "tpu.trace_stop"() : () -> ()
      %61 = arith.addf %38, %60 : vector<8x128xf32>
      %c0_25 = arith.constant 0 : index
      %c0_26 = arith.constant 0 : index
      %62 = vector.load %arg6[%c0_25, %c0_26] : memref<8x1xf32, #tpu.memory_space<vmem>>, vector<8x1xf32>
      %63 = vector.broadcast %62 : vector<8x1xf32> to vector<8x128xf32>
      %64 = arith.addf %61, %63 : vector<8x128xf32>
      %65 = arith.index_cast %arg1 : i32 to index
      %c0_27 = arith.constant 0 : index
      %c0_28 = arith.constant 0 : index
      %66 = vector.load %arg10[%65, %c0_27, %c0_28] : memref<1x8x128xf32, #tpu.memory_space<vmem>>, vector<1x8x128xf32>
      %67 = vector.shape_cast %66 : vector<1x8x128xf32> to vector<8x128xf32>
      %68 = vector.shape_cast %64 : vector<8x128xf32> to vector<1x8x128xf32>
      tpu.vector_store %arg10[%65, %c0_27, %c0_28], %68 {strides = array<i32>} : memref<1x8x128xf32, #tpu.memory_space<vmem>>, vector<1x8x128xf32>,
    } else {
    }
    %c1_i32 = arith.constant 1 : i32
    %3 = arith.cmpi eq, %arg0, %c1_i32 : i32
    %c0_i32_1 = arith.constant 0 : i32
    %4 = arith.cmpi eq, %arg1, %c0_i32_1 : i32
    %5 = arith.andi %3, %4 : i1
    %6 = arith.extui %5 : i1 to i32
    %c0_i32_2 = arith.constant 0 : i32
    %7 = arith.cmpi ne, %6, %c0_i32_2 : i32
    scf.if %7 {
      %c0 = arith.constant 0 : index
      %c0_5 = arith.constant 0 : index
      %c0_6 = arith.constant 0 : index
      %11 = vector.load %arg10[%c0, %c0_5, %c0_6] : memref<1x8x128xf32, #tpu.memory_space<vmem>>, vector<1x8x128xf32>
      %cst = arith.constant dense<0.000000e+00> : vector<8x128xf32>
      %12 = vector.multi_reduction <add>, %11, %cst [0] : vector<1x8x128xf32> to vector<8x128xf32>
      %cst_7 = arith.constant dense<0.000000e+00> : vector<8xf32>
      %13 = vector.multi_reduction <add>, %12, %cst_7 [1] : vector<8x128xf32> to vector<8xf32>
      %14 = vector.shape_cast %13 : vector<8xf32> to vector<8x1xf32>
      %cst_8 = arith.constant 7.812500e-03 : f32
      %15 = vector.broadcast %cst_8 : f32 to vector<8x1xf32>
      %16 = arith.mulf %14, %15 : vector<8x1xf32>
      %17 = vector.shape_cast %16 : vector<8x1xf32> to vector<1x8x1xf32>
      %18 = vector.broadcast %17 : vector<1x8x1xf32> to vector<1x8x128xf32>
      %19 = arith.subf %11, %18 : vector<1x8x128xf32>
      %20 = arith.mulf %19, %19 : vector<1x8x128xf32>
      %cst_9 = arith.constant dense<0.000000e+00> : vector<8x128xf32>
      %21 = vector.multi_reduction <add>, %20, %cst_9 [0] : vector<1x8x128xf32> to vector<8x128xf32>
      %cst_10 = arith.constant dense<0.000000e+00> : vector<8xf32>
      %22 = vector.multi_reduction <add>, %21, %cst_10 [1] : vector<8x128xf32> to vector<8xf32>
      %23 = vector.shape_cast %22 : vector<8xf32> to vector<8x1xf32>
      %cst_11 = arith.constant 7.812500e-03 : f32
      %24 = vector.broadcast %cst_11 : f32 to vector<8x1xf32>
      %25 = arith.mulf %23, %24 : vector<8x1xf32>
      %cst_12 = arith.constant 9.99999974E-6 : f32
      %26 = vector.broadcast %cst_12 : f32 to vector<8x1xf32>
      %27 = arith.addf %25, %26 : vector<8x1xf32>
      %28 = math.rsqrt %27 : vector<8x1xf32>
      %c0_13 = arith.constant 0 : index
      %c0_14 = arith.constant 0 : index
      %29 = vector.load %arg7[%c0_13, %c0_14] : memref<8x1xf32, #tpu.memory_space<vmem>>, vector<8x1xf32>
      %30 = arith.mulf %29, %28 : vector<8x1xf32>
      %c0_15 = arith.constant 0 : index
      %c0_16 = arith.constant 0 : index
      %31 = vector.load %arg11[%c0_15, %c0_16] : memref<8x1xf32, #tpu.memory_space<vmem>>, vector<8x1xf32>
      tpu.vector_store %arg11[%c0_15, %c0_16], %30 {strides = array<i32>} : memref<8x1xf32, #tpu.memory_space<vmem>>, vector<8x1xf32>,
      %c0_17 = arith.constant 0 : index
      %c0_18 = arith.constant 0 : index
      %32 = vector.load %arg8[%c0_17, %c0_18] : memref<8x1xf32, #tpu.memory_space<vmem>>, vector<8x1xf32>
      %33 = arith.mulf %16, %30 : vector<8x1xf32>
      %34 = arith.subf %32, %33 : vector<8x1xf32>
      %c0_19 = arith.constant 0 : index
      %c0_20 = arith.constant 0 : index
      %35 = vector.load %arg12[%c0_19, %c0_20] : memref<8x1xf32, #tpu.memory_space<vmem>>, vector<8x1xf32>
      tpu.vector_store %arg12[%c0_19, %c0_20], %34 {strides = array<i32>} : memref<8x1xf32, #tpu.memory_space<vmem>>, vector<8x1xf32>,
    } else {
    }
    %c1_i32_3 = arith.constant 1 : i32
    %8 = arith.cmpi eq, %arg0, %c1_i32_3 : i32
    %9 = arith.extui %8 : i1 to i32
    %c0_i32_4 = arith.constant 0 : i32
    %10 = arith.cmpi ne, %9, %c0_i32_4 : i32
    scf.if %10 {
      %11 = arith.index_cast %arg1 : i32 to index
      %c0 = arith.constant 0 : index
      %c0_5 = arith.constant 0 : index
      %12 = vector.load %arg10[%11, %c0, %c0_5] : memref<1x8x128xf32, #tpu.memory_space<vmem>>, vector<1x8x128xf32>
      %13 = vector.shape_cast %12 : vector<1x8x128xf32> to vector<8x128xf32>
      %c0_6 = arith.constant 0 : index
      %c0_7 = arith.constant 0 : index
      %14 = vector.load %arg11[%c0_6, %c0_7] : memref<8x1xf32, #tpu.memory_space<vmem>>, vector<8x1xf32>
      %15 = vector.broadcast %14 : vector<8x1xf32> to vector<8x128xf32>
      %16 = arith.mulf %13, %15 : vector<8x128xf32>
      %c0_8 = arith.constant 0 : index
      %c0_9 = arith.constant 0 : index
      %17 = vector.load %arg12[%c0_8, %c0_9] : memref<8x1xf32, #tpu.memory_space<vmem>>, vector<8x1xf32>
      %18 = vector.broadcast %17 : vector<8x1xf32> to vector<8x128xf32>
      %19 = arith.addf %16, %18 : vector<8x128xf32>
      %cst = arith.constant 0.000000e+00 : f32
      %20 = vector.broadcast %cst : f32 to vector<8x128xf32>
      %21 = arith.maximumf %19, %20 : vector<8x128xf32>
      %c0_10 = arith.constant 0 : index
      %c0_11 = arith.constant 0 : index
      %22 = vector.load %arg9[%c0_10, %c0_11] : memref<8x128xf32, #tpu.memory_space<vmem>>, vector<8x128xf32>
      tpu.vector_store %arg9[%c0_10, %c0_11], %21 {strides = array<i32>} : memref<8x128xf32, #tpu.memory_space<vmem>>, vector<8x128xf32>,
    } else {
    }
    return
  }
  func.func @transform_0(%arg0: i32, %arg1: i32) -> (i32, i32) {
    %c0_i32 = arith.constant 0 : i32
    %c0_i32_0 = arith.constant 0 : i32
    return %arg1, %c0_i32 : i32, i32
  }
  func.func @transform_1(%arg0: i32, %arg1: i32) -> (i32, i32) {
    %c0_i32 = arith.constant 0 : i32
    %c0_i32_0 = arith.constant 0 : i32
    %c0_i32_1 = arith.constant 0 : i32
    return %c0_i32, %c0_i32_0 : i32, i32
  }
  func.func @transform_2(%arg0: i32, %arg1: i32) -> (i32, i32) {
    %c0_i32 = arith.constant 0 : i32
    %c0_i32_0 = arith.constant 0 : i32
    %c0_i32_1 = arith.constant 0 : i32
    return %c0_i32, %c0_i32_0 : i32, i32
  }
  func.func @transform_3(%arg0: i32, %arg1: i32) -> (i32, i32) {
    %c0_i32 = arith.constant 0 : i32
    %c0_i32_0 = arith.constant 0 : i32
    %c0_i32_1 = arith.constant 0 : i32
    return %c0_i32, %c0_i32_0 : i32, i32
  }
  func.func @transform_4(%arg0: i32, %arg1: i32) -> (i32, i32) {
    %c0_i32 = arith.constant 0 : i32
    %c0_i32_0 = arith.constant 0 : i32
    %c0_i32_1 = arith.constant 0 : i32
    return %c0_i32, %c0_i32_0 : i32, i32
  }
  func.func @transform_5(%arg0: i32, %arg1: i32) -> (i32, i32) {
    %c0_i32 = arith.constant 0 : i32
    %c0_i32_0 = arith.constant 0 : i32
    %c0_i32_1 = arith.constant 0 : i32
    return %c0_i32, %c0_i32_0 : i32, i32
  }
  func.func @transform_6(%arg0: i32, %arg1: i32) -> (i32, i32) {
    %c0_i32 = arith.constant 0 : i32
    %c0_i32_0 = arith.constant 0 : i32
    %c0_i32_1 = arith.constant 0 : i32
    return %c0_i32, %c0_i32_0 : i32, i32
  }
  func.func @transform_7(%arg0: i32, %arg1: i32) -> (i32, i32) {
    %c0_i32 = arith.constant 0 : i32
    %c0_i32_0 = arith.constant 0 : i32
    return %c0_i32, %arg1 : i32, i32
  }
}

</mosaic_0001>

<llo_original>
// kernel: tpu_custom_call.1
$region0: #{tpu_custom_call.1}
  #allocation0 [shape = 'u32[]', space=smem, size = 0x4, offset = 0x4, fixed_abs, tag = 'smem constant byte address 0x4 - core index']
  #allocation1 [shape = 'u32[72,128]{1,0:T(1,128)}', space=vmem, size = 0x9000, scoped, tag = 'internal scratch']
  #allocation2 [shape = 'f32[1,8,128]{2,1,0:T(8,128)}', space=vmem, size = 0x1000, scoped, tag = 'scratch operand']
  #allocation3 [shape = 'f32[8,1]{1,0:T(8,128)}', space=vmem, size = 0x1000, scoped, tag = 'scratch operand']
  #allocation4 [shape = 'f32[8,1]{1,0:T(8,128)}', space=vmem, size = 0x1000, scoped, tag = 'scratch operand']
  %s0 = inlined_call_operand.vmem [shape: f32[128,8], index: 0, kind: input, shape index: {}]
  %s1 = inlined_call_operand.vmem [shape: f32[8,24], index: 1, kind: input, shape index: {}]
  %s2 = inlined_call_operand.vmem [shape: f32[1,24], index: 2, kind: input, shape index: {}]
  %s3 = inlined_call_operand.vmem [shape: f32[8,8], index: 3, kind: input, shape index: {}]
  %s4 = inlined_call_operand.vmem [shape: f32[8,1], index: 4, kind: input, shape index: {}]
  %s5 = inlined_call_operand.vmem [shape: f32[8,1], index: 5, kind: input, shape index: {}]
  %s6 = inlined_call_operand.vmem [shape: f32[8,1], index: 6, kind: input, shape index: {}]
  %s7 = inlined_call_operand.hbm [shape: f32[8,128], index: 7, kind: output, shape index: {}]
  %s8 = sld [smem:[#allocation0]]
  $region73: #{tpu_custom_call.1} parent=0
    _
  %s10 = ssub.s32 1, %s8
  %s11 = scalar_select 0, %s10, %s8
  $region1: #{tpu_custom_call.1} parent=0
    #allocation5 [shape = 'u8[4096]{0}', space=vmem, size = 0x1000, scoped, tag = 'output window, operand 0, single buffered']
    #allocation6 [shape = 's32[2]{0}', space=sflag, size = 0x8, scoped, tag = 'scoped memory for tpu_custom_call.1']
    %12 = vsyncpa [#allocation6], 0
    loop: start=0, step=1, limit=4
    $region2: #{tpu_custom_call.1} parent=1 // loop_pre_header
      _
    $region3: #{tpu_custom_call.1} parent=1 // loop_header
      %s14 = sphi 0, %s18
      %p15 = scmp.ge.s32.totalorder %s14, 4
      %s21 = sphi 0, %s33
      %s22 = sphi 0, %s29
      %s23 = sphi 0, %s21
      %s24 = sphi 0, %s22
      %s25 = sphi 0, %s23
      %s26 = sphi 0, %s24
      %s36 = sphi 0, %s38
      %s39 = sphi 0, %s36
      %s40 = sphi 0, %s39
      %s56 = sphi 0, %s40
      %s60 = sphi 0, %s60
      %s62 = sphi 0, %s60
      %s63 = sphi 0, %s62
      %s77 = sphi 0, %s63
      %s81 = sphi 0, %s81
      %s83 = sphi 0, %s81
      %s84 = sphi 0, %s83
      %s98 = sphi 0, %s84
      %s102 = sphi 0, %s102
      %s104 = sphi 0, %s102
      %s105 = sphi 0, %s104
      %s119 = sphi 0, %s105
      %s123 = sphi 0, %s123
      %s125 = sphi 0, %s123
      %s126 = sphi 0, %s125
      %s140 = sphi 0, %s126
      %s144 = sphi 0, %s144
      %s146 = sphi 0, %s144
      %s147 = sphi 0, %s146
      %s161 = sphi 0, %s147
      %s165 = sphi 0, %s165
      %s167 = sphi 0, %s165
      %s168 = sphi 0, %s167
      %s182 = sphi 0, %s168
      %s188 = sphi 0, %s190
      %s191 = sphi 0, %s188
      %s192 = sphi 0, %s191
      %s208 = sphi 0, %s192
    $region4: #{tpu_custom_call.1} parent=1 // loop_header_branch
      %17 = sbr.rel (%p15) target = $region8
    $region5: #{tpu_custom_call.1} parent=1 // loop_body
      %s19 = ssub.s32 %s14, 1
      %s20 = ssub.s32 %s14, 2
      %s27 = sadd.s32 1, %s22
      %p28 = scmp.ge.s32.totalorder %s27, 1
      %s29 = scalar_select %p28, 0, %s27
      %s30 = sadd.s32 1, %s21
      %s31 = scalar_select %p28, %s30, %s21
      %p32 = scmp.ge.s32.totalorder %s31, 2
      %s33 = scalar_select %p32, 0, %s31
      %s34 = ssub.s32 %s22, %s29
      %p35 = scmp.eq.s32.totalorder %s34, 0
      %s37 = sadd.s32 %s36, 1
      %s38 = scalar_select %p35, %s36, %s37
      %p41 = pneg %p35
      %p42 = scmp.eq.s32.totalorder %s14, 1
      %p43 = por %p41, %p42
      %p44 = scmp.ne.s32.totalorder %s36, %s39
      %p45 = scmp.eq.s32.totalorder %s14, 0
      %p46 = por %p44, %p45
      %p47 = scmp.ne.s32.totalorder %s36, %s39
      %p48 = scmp.eq.s32.totalorder %s19, 1
      %p49 = por %p47, %p48
      %p50 = scmp.ne.s32.totalorder %s39, %s40
      %p51 = scmp.eq.s32.totalorder %s19, 0
      %p52 = por %p50, %p51
      %p53 = scmp.ne.s32.totalorder %s39, %s40
      %p54 = scmp.eq.s32.totalorder %s20, 1
      %p55 = por %p53, %p54
      %p57 = scmp.ne.s32.totalorder %s40, %s56
      %p58 = scmp.eq.s32.totalorder %s20, 0
      %p59 = por %p57, %p58
      %s61 = sadd.s32 %s60, 1
      %p64 = scmp.eq.s32.totalorder %s14, 1
      %p65 = scmp.ne.s32.totalorder %s60, %s62
      %p66 = scmp.eq.s32.totalorder %s14, 0
      %p67 = por %p65, %p66
      %p68 = scmp.ne.s32.totalorder %s60, %s62
      %p69 = scmp.eq.s32.totalorder %s19, 1
      %p70 = por %p68, %p69
      %p71 = scmp.ne.s32.totalorder %s62, %s63
      %p72 = scmp.eq.s32.totalorder %s19, 0
      %p73 = por %p71, %p72
      %p74 = scmp.ne.s32.totalorder %s62, %s63
      %p75 = scmp.eq.s32.totalorder %s20, 1
      %p76 = por %p74, %p75
      %p78 = scmp.ne.s32.totalorder %s63, %s77
      %p79 = scmp.eq.s32.totalorder %s20, 0
      %p80 = por %p78, %p79
      %s82 = sadd.s32 %s81, 1
      %p85 = scmp.eq.s32.totalorder %s14, 1
      %p86 = scmp.ne.s32.totalorder %s81, %s83
      %p87 = scmp.eq.s32.totalorder %s14, 0
      %p88 = por %p86, %p87
      %p89 = scmp.ne.s32.totalorder %s81, %s83
      %p90 = scmp.eq.s32.totalorder %s19, 1
      %p91 = por %p89, %p90
      %p92 = scmp.ne.s32.totalorder %s83, %s84
      %p93 = scmp.eq.s32.totalorder %s19, 0
      %p94 = por %p92, %p93
      %p95 = scmp.ne.s32.totalorder %s83, %s84
      %p96 = scmp.eq.s32.totalorder %s20, 1
      %p97 = por %p95, %p96
      %p99 = scmp.ne.s32.totalorder %s84, %s98
      %p100 = scmp.eq.s32.totalorder %s20, 0
      %p101 = por %p99, %p100
      %s103 = sadd.s32 %s102, 1
      %p106 = scmp.eq.s32.totalorder %s14, 1
      %p107 = scmp.ne.s32.totalorder %s102, %s104
      %p108 = scmp.eq.s32.totalorder %s14, 0
      %p109 = por %p107, %p108
      %p110 = scmp.ne.s32.totalorder %s102, %s104
      %p111 = scmp.eq.s32.totalorder %s19, 1
      %p112 = por %p110, %p111
      %p113 = scmp.ne.s32.totalorder %s104, %s105
      %p114 = scmp.eq.s32.totalorder %s19, 0
      %p115 = por %p113, %p114
      %p116 = scmp.ne.s32.totalorder %s104, %s105
      %p117 = scmp.eq.s32.totalorder %s20, 1
      %p118 = por %p116, %p117
      %p120 = scmp.ne.s32.totalorder %s105, %s119
      %p121 = scmp.eq.s32.totalorder %s20, 0
      %p122 = por %p120, %p121
      %s124 = sadd.s32 %s123, 1
      %p127 = scmp.eq.s32.totalorder %s14, 1
      %p128 = scmp.ne.s32.totalorder %s123, %s125
      %p129 = scmp.eq.s32.totalorder %s14, 0
      %p130 = por %p128, %p129
      %p131 = scmp.ne.s32.totalorder %s123, %s125
      %p132 = scmp.eq.s32.totalorder %s19, 1
      %p133 = por %p131, %p132
      %p134 = scmp.ne.s32.totalorder %s125, %s126
      %p135 = scmp.eq.s32.totalorder %s19, 0
      %p136 = por %p134, %p135
      %p137 = scmp.ne.s32.totalorder %s125, %s126
      %p138 = scmp.eq.s32.totalorder %s20, 1
      %p139 = por %p137, %p138
      %p141 = scmp.ne.s32.totalorder %s126, %s140
      %p142 = scmp.eq.s32.totalorder %s20, 0
      %p143 = por %p141, %p142
      %s145 = sadd.s32 %s144, 1
      %p148 = scmp.eq.s32.totalorder %s14, 1
      %p149 = scmp.ne.s32.totalorder %s144, %s146
      %p150 = scmp.eq.s32.totalorder %s14, 0
      %p151 = por %p149, %p150
      %p152 = scmp.ne.s32.totalorder %s144, %s146
      %p153 = scmp.eq.s32.totalorder %s19, 1
      %p154 = por %p152, %p153
      %p155 = scmp.ne.s32.totalorder %s146, %s147
      %p156 = scmp.eq.s32.totalorder %s19, 0
      %p157 = por %p155, %p156
      %p158 = scmp.ne.s32.totalorder %s146, %s147
      %p159 = scmp.eq.s32.totalorder %s20, 1
      %p160 = por %p158, %p159
      %p162 = scmp.ne.s32.totalorder %s147, %s161
      %p163 = scmp.eq.s32.totalorder %s20, 0
      %p164 = por %p162, %p163
      %s166 = sadd.s32 %s165, 1
      %p169 = scmp.eq.s32.totalorder %s14, 1
      %p170 = scmp.ne.s32.totalorder %s165, %s167
      %p171 = scmp.eq.s32.totalorder %s14, 0
      %p172 = por %p170, %p171
      %p173 = scmp.ne.s32.totalorder %s165, %s167
      %p174 = scmp.eq.s32.totalorder %s19, 1
      %p175 = por %p173, %p174
      %p176 = scmp.ne.s32.totalorder %s167, %s168
      %p177 = scmp.eq.s32.totalorder %s19, 0
      %p178 = por %p176, %p177
      %p179 = scmp.ne.s32.totalorder %s167, %s168
      %p180 = scmp.eq.s32.totalorder %s20, 1
      %p181 = por %p179, %p180
      %p183 = scmp.ne.s32.totalorder %s168, %s182
      %p184 = scmp.eq.s32.totalorder %s20, 0
      %p185 = por %p183, %p184
      %s186 = ssub.s32 %s22, %s29
      %p187 = scmp.eq.s32.totalorder %s186, 0
      %s189 = sadd.s32 %s188, 1
      %s190 = scalar_select %p187, %s188, %s189
      %p193 = pneg %p187
      %p194 = scmp.eq.s32.totalorder %s14, 1
      %p195 = por %p193, %p194
      %p196 = scmp.ne.s32.totalorder %s188, %s191
      %p197 = scmp.eq.s32.totalorder %s14, 0
      %p198 = por %p196, %p197
      %p199 = scmp.ne.s32.totalorder %s188, %s191
      %p200 = scmp.eq.s32.totalorder %s19, 1
      %p201 = por %p199, %p200
      %p202 = scmp.ne.s32.totalorder %s191, %s192
      %p203 = scmp.eq.s32.totalorder %s19, 0
      %p204 = por %p202, %p203
      %p205 = scmp.ne.s32.totalorder %s191, %s192
      %p206 = scmp.eq.s32.totalorder %s20, 1
      %p207 = por %p205, %p206
      %p209 = scmp.ne.s32.totalorder %s192, %s208
      %p210 = scmp.eq.s32.totalorder %s20, 0
      %p211 = por %p209, %p210
      %p212 = scmp.le.s32.totalorder 1, %s14
      %p213 = scmp.lt.s32.totalorder %s14, 3
      %p214 = pnand %p212, %p213
      %p215 = pneg %p214
      // Predicated region
      $region9: #{tpu_custom_call.1} parent=5 // pred_check
        _
      $region10: #{tpu_custom_call.1} parent=5 // pred_check_branch
        %217 = sbr.rel (%p214) target = $region12
      $region11: #{tpu_custom_call.1} parent=5 // pred_region
        %s218 = ssub.s32 %s14, 1
        // Predicated region
        $region13: #{tpu_custom_call.1} parent=11 // pred_check
          %p219 = pneg %p52
        $region14: #{tpu_custom_call.1} parent=11 // pred_check_branch
          %221 = sbr.rel (%p219) target = $region16
        $region15: #{tpu_custom_call.1} parent=11 // pred_region
          %s222 = smul.u32 16, %s24
          %p223 = scmp.lt.s32.totalorder %s222, 15
          %s224 = scalar_select %p223, %s222, 15
          %s225 = smul.addr %s224, 8
          %s226 = scalar_lea.vmem %s0, %s225
          %s227 = smul.u32 16, %s24
        $region16: #{tpu_custom_call.1} parent=11 // pred_fallthru
          _
        // Predicated region
        $region17: #{tpu_custom_call.1} parent=11 // pred_check
          %p228 = pneg %p73
        $region18: #{tpu_custom_call.1} parent=11 // pred_check_branch
          %230 = sbr.rel (%p228) target = $region20
        $region19: #{tpu_custom_call.1} parent=11 // pred_region
          _
        $region20: #{tpu_custom_call.1} parent=11 // pred_fallthru
          _
        // Predicated region
        $region21: #{tpu_custom_call.1} parent=11 // pred_check
          %p231 = pneg %p94
        $region22: #{tpu_custom_call.1} parent=11 // pred_check_branch
          %233 = sbr.rel (%p231) target = $region24
        $region23: #{tpu_custom_call.1} parent=11 // pred_region
          _
        $region24: #{tpu_custom_call.1} parent=11 // pred_fallthru
          _
        // Predicated region
        $region25: #{tpu_custom_call.1} parent=11 // pred_check
          %p234 = pneg %p115
        $region26: #{tpu_custom_call.1} parent=11 // pred_check_branch
          %236 = sbr.rel (%p234) target = $region28
        $region27: #{tpu_custom_call.1} parent=11 // pred_region
          _
        $region28: #{tpu_custom_call.1} parent=11 // pred_fallthru
          _
        // Predicated region
        $region29: #{tpu_custom_call.1} parent=11 // pred_check
          %p237 = pneg %p136
        $region30: #{tpu_custom_call.1} parent=11 // pred_check_branch
          %239 = sbr.rel (%p237) target = $region32
        $region31: #{tpu_custom_call.1} parent=11 // pred_region
          _
        $region32: #{tpu_custom_call.1} parent=11 // pred_fallthru
          _
        // Predicated region
        $region33: #{tpu_custom_call.1} parent=11 // pred_check
          %p240 = pneg %p157
        $region34: #{tpu_custom_call.1} parent=11 // pred_check_branch
          %242 = sbr.rel (%p240) target = $region36
        $region35: #{tpu_custom_call.1} parent=11 // pred_region
          _
        $region36: #{tpu_custom_call.1} parent=11 // pred_fallthru
          _
        // Predicated region
        $region37: #{tpu_custom_call.1} parent=11 // pred_check
          %p243 = pneg %p178
        $region38: #{tpu_custom_call.1} parent=11 // pred_check_branch
          %245 = sbr.rel (%p243) target = $region40
        $region39: #{tpu_custom_call.1} parent=11 // pred_region
          _
        $region40: #{tpu_custom_call.1} parent=11 // pred_fallthru
          _
      $region12: #{tpu_custom_call.1} parent=5 // pred_fallthru
        _
      %p246 = scmp.lt.s32.totalorder %s14, 2
      // Predicated region
      $region41: #{tpu_custom_call.1} parent=5 // pred_check
        %p247 = pneg %p246
      $region42: #{tpu_custom_call.1} parent=5 // pred_check_branch
        %249 = sbr.rel (%p247) target = $region44
      $region43: #{tpu_custom_call.1} parent=5 // pred_region
        _
      $region44: #{tpu_custom_call.1} parent=5 // pred_fallthru
        _
      %p250 = scmp.le.s32.totalorder 1, %s14
      %p251 = scmp.lt.s32.totalorder %s14, 3
      %p252 = pnand %p250, %p251
      %p253 = pneg %p252
      // Predicated region
      $region45: #{tpu_custom_call.1} parent=5 // pred_check
        _
      $region46: #{tpu_custom_call.1} parent=5 // pred_check_branch
        %255 = sbr.rel (%p252) target = $region48
      $region47: #{tpu_custom_call.1} parent=5 // pred_region
        %s256 = ssub.s32 %s14, 1
        %s257 = smul.u32 16, %s24
        %p258 = scmp.lt.s32.totalorder %s257, 15
        %s259 = scalar_select %p258, %s257, 15
        %s260 = smul.addr %s259, 8
        %s261 = scalar_lea.vmem %s0, %s260
        %p262 = pneg %p52
        %p263 = pneg %p49
        %p264 = pneg %p73
        %p265 = pneg %p70
        %p266 = pneg %p94
        %p267 = pneg %p91
        %p268 = pneg %p115
        %p269 = pneg %p112
        %p270 = pneg %p136
        %p271 = pneg %p133
        %p272 = pneg %p157
        %p273 = pneg %p154
        %p274 = pneg %p178
        %p275 = pneg %p175
        %p276 = pneg %p204
        %p277 = pneg %p201
        %s278 = smul.u32 16, %s24
        %p279 = scmp.lt.s32.totalorder %s278, 15
        %s280 = scalar_select %p279, %s278, 15
        %s281 = smul.addr %s280, 8
        %s282 = scalar_lea.vmem %s0, %s281
        %s283 = smul.u32 16, %s24
        %p284 = scmp.eq.s32.totalorder %s23, 0
        // Predicated region
        $region49: #{tpu_custom_call.1} parent=47 // pred_check
          %p285 = pneg %p284
        $region50: #{tpu_custom_call.1} parent=47 // pred_check_branch
          %287 = sbr.rel (%p285) target = $region52
        $region51: #{tpu_custom_call.1} parent=47 // pred_region
          %v288 = vld [vmem:[%s282] sm:$0xff]
          %v289 = vld [vmem:[%s282 + $0x8] sm:$0xff]
          %v290 = vld [vmem:[%s282 + $0x10] sm:$0xff]
          %v291 = vld [vmem:[%s282 + $0x18] sm:$0xff]
          %v292 = vld [vmem:[%s282 + $0x20] sm:$0xff]
          %v293 = vld [vmem:[%s282 + $0x28] sm:$0xff]
          %v294 = vld [vmem:[%s282 + $0x30] sm:$0xff]
          %v295 = vld [vmem:[%s282 + $0x38] sm:$0xff]
          %v296 = vld [vmem:[%s282 + $0x40] sm:$0xff]
          %v297 = vld [vmem:[%s282 + $0x48] sm:$0xff]
          %v298 = vld [vmem:[%s282 + $0x50] sm:$0xff]
          %v299 = vld [vmem:[%s282 + $0x58] sm:$0xff]
          %v300 = vld [vmem:[%s282 + $0x60] sm:$0xff]
          %v301 = vld [vmem:[%s282 + $0x68] sm:$0xff]
          %v302 = vld [vmem:[%s282 + $0x70] sm:$0xff]
          %v303 = vld [vmem:[%s282 + $0x78] sm:$0xff]
          %v304 = vld [vmem:[%s1] sm:$0xff]
          %v305 = vld [vmem:[%s2] sm:$0x1]
          %v307 = vperm.slane %v305, 0
          %vm309 = vcmask 64512
          %v311 = vsel %vm309, %v288, 0
          %v314 = vsel %vm309, %v289, 0
          %v317 = vsel %vm309, %v290, 0
          %v320 = vsel %vm309, %v291, 0
          %v323 = vsel %vm309, %v292, 0
          %v326 = vsel %vm309, %v293, 0
          %v329 = vsel %vm309, %v294, 0
          %v332 = vsel %vm309, %v295, 0
          %v335 = vsel %vm309, %v296, 0
          %v338 = vsel %vm309, %v297, 0
          %v341 = vsel %vm309, %v298, 0
          %v344 = vsel %vm309, %v299, 0
          %v347 = vsel %vm309, %v300, 0
          %v350 = vsel %vm309, %v301, 0
          %v353 = vsel %vm309, %v302, 0
          %v356 = vsel %vm309, %v303, 0
          %358 = vmatpush.msra.mxu0 0.0
          %359 = vmatpush.msra.mxu0 0.0
          %360 = vmatpush.msra.mxu0 0.0
          %361 = vmatpush.msra.mxu0 0.0
          %362 = vmatpush.msra.mxu0 0.0
          %363 = vmatpush.msra.mxu0 0.0
          %364 = vmatpush.msra.mxu0 0.0
          %365 = vmatpush.msra.mxu0 0.0
          %366 = vmatpush.msra.mxu0 0.0
          %367 = vmatpush.msra.mxu0 0.0
          %368 = vmatpush.msra.mxu0 0.0
          %369 = vmatpush.msra.mxu0 0.0
          %370 = vmatpush.msra.mxu0 0.0
          %371 = vmatpush.msra.mxu0 0.0
          %372 = vmatpush.msra.mxu0 0.0
          %373 = vmatpush.msra.mxu0 %v304
          %374 = vmatmul.f32.gmra.mxu0 %v311
          %v375 = vpop.f32.mrf.mxu0
          %v376 = vadd.f32 %v307, %v375
          %377 = vmatmul.f32.gmra.mxu0 %v314
          %v378 = vpop.f32.mrf.mxu0
          %v379 = vadd.f32 %v307, %v378
          %380 = vmatmul.f32.gmra.mxu0 %v317
          %v381 = vpop.f32.mrf.mxu0
          %v382 = vadd.f32 %v307, %v381
          %383 = vmatmul.f32.gmra.mxu0 %v320
          %v384 = vpop.f32.mrf.mxu0
          %v385 = vadd.f32 %v307, %v384
          %386 = vmatmul.f32.gmra.mxu0 %v323
          %v387 = vpop.f32.mrf.mxu0
          %v388 = vadd.f32 %v307, %v387
          %389 = vmatmul.f32.gmra.mxu0 %v326
          %v390 = vpop.f32.mrf.mxu0
          %v391 = vadd.f32 %v307, %v390
          %392 = vmatmul.f32.gmra.mxu0 %v329
          %v393 = vpop.f32.mrf.mxu0
          %v394 = vadd.f32 %v307, %v393
          %395 = vmatmul.f32.gmra.mxu0 %v332
          %v396 = vpop.f32.mrf.mxu0
          %v397 = vadd.f32 %v307, %v396
          %398 = vmatmul.f32.gmra.mxu0 %v335
          %v399 = vpop.f32.mrf.mxu0
          %v400 = vadd.f32 %v307, %v399
          %401 = vmatmul.f32.gmra.mxu0 %v338
          %v402 = vpop.f32.mrf.mxu0
          %v403 = vadd.f32 %v307, %v402
          %404 = vmatmul.f32.gmra.mxu0 %v341
          %v405 = vpop.f32.mrf.mxu0
          %v406 = vadd.f32 %v307, %v405
          %407 = vmatmul.f32.gmra.mxu0 %v344
          %v408 = vpop.f32.mrf.mxu0
          %v409 = vadd.f32 %v307, %v408
          %410 = vmatmul.f32.gmra.mxu0 %v347
          %v411 = vpop.f32.mrf.mxu0
          %v412 = vadd.f32 %v307, %v411
          %413 = vmatmul.f32.gmra.mxu0 %v350
          %v414 = vpop.f32.mrf.mxu0
          %v415 = vadd.f32 %v307, %v414
          %416 = vmatmul.f32.gmra.mxu0 %v353
          %v417 = vpop.f32.mrf.mxu0
          %v418 = vadd.f32 %v307, %v417
          %419 = vmatmul.f32.gmra.mxu0 %v356
          %v420 = vpop.f32.mrf.mxu0
          %v421 = vadd.f32 %v307, %v420
          %422 = vdwg.mxu0
          %425 = vrot.lane.b32.xlu0 %v376, 120
          %v426 = vpop.permute.xlu0 %425
          %427 = vrot.lane.b32.xlu0 %v379, 120
          %v428 = vpop.permute.xlu0 %427
          %vm429 = vcmask 31744
          %v430 = vsel %vm429, %v376, 0
          %v432 = vsel %vm429, %v379, 0
          %v434 = vsel %vm429, %v426, 0
          %v436 = vsel %vm429, %v428, 0
          %438 = vmatpush.xpose.msra.mxu0 0.0
          %439 = vmatpush.xpose.msra.mxu0 0.0
          %440 = vmatpush.xpose.msra.mxu0 0.0
          %441 = vmatpush.xpose.msra.mxu0 0.0
          %442 = vmatpush.xpose.msra.mxu0 0.0
          %443 = vmatpush.xpose.msra.mxu0 0.0
          %444 = vmatpush.xpose.msra.mxu0 0.0
          %445 = vmatpush.xpose.msra.mxu0 0.0
          %446 = vmatpush.xpose.msra.mxu0 0.0
          %447 = vmatpush.xpose.msra.mxu0 0.0
          %448 = vmatpush.xpose.msra.mxu0 0.0
          %449 = vmatpush.xpose.msra.mxu0 0.0
          %450 = vmatpush.xpose.msra.mxu0 0.0
          %451 = vmatpush.xpose.msra.mxu0 0.0
          %452 = vmatpush.xpose.msra.mxu0 %v436
          %453 = vmatpush.xpose.msra.mxu0 %v434
          %454 = vmatmul.f32.gmra.mxu0 %v430
          %v455 = vpop.f32.mrf.mxu0
          %v456 = vadd.f32 0.0, %v455
          %457 = vmatmul.f32.gmra.mxu0 %v432
          %v458 = vpop.f32.mrf.mxu0
          %v459 = vadd.f32 0.0, %v458
          %460 = vdwg.mxu0
          %463 = vrot.lane.b32.xlu0 %v382, 120
          %v464 = vpop.permute.xlu0 %463
          %465 = vrot.lane.b32.xlu0 %v385, 120
          %v466 = vpop.permute.xlu0 %465
          %v467 = vsel %vm429, %v382, 0
          %v469 = vsel %vm429, %v385, 0
          %v471 = vsel %vm429, %v464, 0
          %v473 = vsel %vm429, %v466, 0
          %475 = vmatpush.xpose.msra.mxu0 0.0
          %476 = vmatpush.xpose.msra.mxu0 0.0
          %477 = vmatpush.xpose.msra.mxu0 0.0
          %478 = vmatpush.xpose.msra.mxu0 0.0
          %479 = vmatpush.xpose.msra.mxu0 0.0
          %480 = vmatpush.xpose.msra.mxu0 0.0
          %481 = vmatpush.xpose.msra.mxu0 0.0
          %482 = vmatpush.xpose.msra.mxu0 0.0
          %483 = vmatpush.xpose.msra.mxu0 0.0
          %484 = vmatpush.xpose.msra.mxu0 0.0
          %485 = vmatpush.xpose.msra.mxu0 0.0
          %486 = vmatpush.xpose.msra.mxu0 0.0
          %487 = vmatpush.xpose.msra.mxu0 0.0
          %488 = vmatpush.xpose.msra.mxu0 0.0
          %489 = vmatpush.xpose.msra.mxu0 %v473
          %490 = vmatpush.xpose.msra.mxu0 %v471
          %491 = vmatmul.f32.gmra.mxu0 %v467
          %v492 = vpop.f32.mrf.mxu0
          %v493 = vadd.f32 0.0, %v492
          %494 = vmatmul.f32.gmra.mxu0 %v469
          %v495 = vpop.f32.mrf.mxu0
          %v496 = vadd.f32 0.0, %v495
          %497 = vdwg.mxu0
          %500 = vrot.lane.b32.xlu0 %v388, 120
          %v501 = vpop.permute.xlu0 %500
          %502 = vrot.lane.b32.xlu0 %v391, 120
          %v503 = vpop.permute.xlu0 %502
          %v504 = vsel %vm429, %v388, 0
          %v506 = vsel %vm429, %v391, 0
          %v508 = vsel %vm429, %v501, 0
          %v510 = vsel %vm429, %v503, 0
          %512 = vmatpush.xpose.msra.mxu0 0.0
          %513 = vmatpush.xpose.msra.mxu0 0.0
          %514 = vmatpush.xpose.msra.mxu0 0.0
          %515 = vmatpush.xpose.msra.mxu0 0.0
          %516 = vmatpush.xpose.msra.mxu0 0.0
          %517 = vmatpush.xpose.msra.mxu0 0.0
          %518 = vmatpush.xpose.msra.mxu0 0.0
          %519 = vmatpush.xpose.msra.mxu0 0.0
          %520 = vmatpush.xpose.msra.mxu0 0.0
          %521 = vmatpush.xpose.msra.mxu0 0.0
          %522 = vmatpush.xpose.msra.mxu0 0.0
          %523 = vmatpush.xpose.msra.mxu0 0.0
          %524 = vmatpush.xpose.msra.mxu0 0.0
          %525 = vmatpush.xpose.msra.mxu0 0.0
          %526 = vmatpush.xpose.msra.mxu0 %v510
          %527 = vmatpush.xpose.msra.mxu0 %v508
          %528 = vmatmul.f32.gmra.mxu0 %v504
          %v529 = vpop.f32.mrf.mxu0
          %v530 = vadd.f32 0.0, %v529
          %531 = vmatmul.f32.gmra.mxu0 %v506
          %v532 = vpop.f32.mrf.mxu0
          %v533 = vadd.f32 0.0, %v532
          %534 = vdwg.mxu0
          %537 = vrot.lane.b32.xlu0 %v394, 120
          %v538 = vpop.permute.xlu0 %537
          %539 = vrot.lane.b32.xlu0 %v397, 120
          %v540 = vpop.permute.xlu0 %539
          %v541 = vsel %vm429, %v394, 0
          %v543 = vsel %vm429, %v397, 0
          %v545 = vsel %vm429, %v538, 0
          %v547 = vsel %vm429, %v540, 0
          %549 = vmatpush.xpose.msra.mxu0 0.0
          %550 = vmatpush.xpose.msra.mxu0 0.0
          %551 = vmatpush.xpose.msra.mxu0 0.0
          %552 = vmatpush.xpose.msra.mxu0 0.0
          %553 = vmatpush.xpose.msra.mxu0 0.0
          %554 = vmatpush.xpose.msra.mxu0 0.0
          %555 = vmatpush.xpose.msra.mxu0 0.0
          %556 = vmatpush.xpose.msra.mxu0 0.0
          %557 = vmatpush.xpose.msra.mxu0 0.0
          %558 = vmatpush.xpose.msra.mxu0 0.0
          %559 = vmatpush.xpose.msra.mxu0 0.0
          %560 = vmatpush.xpose.msra.mxu0 0.0
          %561 = vmatpush.xpose.msra.mxu0 0.0
          %562 = vmatpush.xpose.msra.mxu0 0.0
          %563 = vmatpush.xpose.msra.mxu0 %v547
          %564 = vmatpush.xpose.msra.mxu0 %v545
          %565 = vmatmul.f32.gmra.mxu0 %v541
          %v566 = vpop.f32.mrf.mxu0
          %v567 = vadd.f32 0.0, %v566
          %568 = vmatmul.f32.gmra.mxu0 %v543
          %v569 = vpop.f32.mrf.mxu0
          %v570 = vadd.f32 0.0, %v569
          %571 = vdwg.mxu0
          %574 = vrot.lane.b32.xlu0 %v400, 120
          %v575 = vpop.permute.xlu0 %574
          %576 = vrot.lane.b32.xlu0 %v403, 120
          %v577 = vpop.permute.xlu0 %576
          %v578 = vsel %vm429, %v400, 0
          %v580 = vsel %vm429, %v403, 0
          %v582 = vsel %vm429, %v575, 0
          %v584 = vsel %vm429, %v577, 0
          %586 = vmatpush.xpose.msra.mxu0 0.0
          %587 = vmatpush.xpose.msra.mxu0 0.0
          %588 = vmatpush.xpose.msra.mxu0 0.0
          %589 = vmatpush.xpose.msra.mxu0 0.0
          %590 = vmatpush.xpose.msra.mxu0 0.0
          %591 = vmatpush.xpose.msra.mxu0 0.0
          %592 = vmatpush.xpose.msra.mxu0 0.0
          %593 = vmatpush.xpose.msra.mxu0 0.0
          %594 = vmatpush.xpose.msra.mxu0 0.0
          %595 = vmatpush.xpose.msra.mxu0 0.0
          %596 = vmatpush.xpose.msra.mxu0 0.0
          %597 = vmatpush.xpose.msra.mxu0 0.0
          %598 = vmatpush.xpose.msra.mxu0 0.0
          %599 = vmatpush.xpose.msra.mxu0 0.0
          %600 = vmatpush.xpose.msra.mxu0 %v584
          %601 = vmatpush.xpose.msra.mxu0 %v582
          %602 = vmatmul.f32.gmra.mxu0 %v578
          %v603 = vpop.f32.mrf.mxu0
          %v604 = vadd.f32 0.0, %v603
          %605 = vmatmul.f32.gmra.mxu0 %v580
          %v606 = vpop.f32.mrf.mxu0
          %v607 = vadd.f32 0.0, %v606
          %608 = vdwg.mxu0
          %611 = vrot.lane.b32.xlu0 %v406, 120
          %v612 = vpop.permute.xlu0 %611
          %613 = vrot.lane.b32.xlu0 %v409, 120
          %v614 = vpop.permute.xlu0 %613
          %v615 = vsel %vm429, %v406, 0
          %v617 = vsel %vm429, %v409, 0
          %v619 = vsel %vm429, %v612, 0
          %v621 = vsel %vm429, %v614, 0
          %623 = vmatpush.xpose.msra.mxu0 0.0
          %624 = vmatpush.xpose.msra.mxu0 0.0
          %625 = vmatpush.xpose.msra.mxu0 0.0
          %626 = vmatpush.xpose.msra.mxu0 0.0
          %627 = vmatpush.xpose.msra.mxu0 0.0
          %628 = vmatpush.xpose.msra.mxu0 0.0
          %629 = vmatpush.xpose.msra.mxu0 0.0
          %630 = vmatpush.xpose.msra.mxu0 0.0
          %631 = vmatpush.xpose.msra.mxu0 0.0
          %632 = vmatpush.xpose.msra.mxu0 0.0
          %633 = vmatpush.xpose.msra.mxu0 0.0
          %634 = vmatpush.xpose.msra.mxu0 0.0
          %635 = vmatpush.xpose.msra.mxu0 0.0
          %636 = vmatpush.xpose.msra.mxu0 0.0
          %637 = vmatpush.xpose.msra.mxu0 %v621
          %638 = vmatpush.xpose.msra.mxu0 %v619
          %639 = vmatmul.f32.gmra.mxu0 %v615
          %v640 = vpop.f32.mrf.mxu0
          %v641 = vadd.f32 0.0, %v640
          %642 = vmatmul.f32.gmra.mxu0 %v617
          %v643 = vpop.f32.mrf.mxu0
          %v644 = vadd.f32 0.0, %v643
          %645 = vdwg.mxu0
          %648 = vrot.lane.b32.xlu0 %v412, 120
          %v649 = vpop.permute.xlu0 %648
          %650 = vrot.lane.b32.xlu0 %v415, 120
          %v651 = vpop.permute.xlu0 %650
          %v652 = vsel %vm429, %v412, 0
          %v654 = vsel %vm429, %v415, 0
          %v656 = vsel %vm429, %v649, 0
          %v658 = vsel %vm429, %v651, 0
          %660 = vmatpush.xpose.msra.mxu0 0.0
          %661 = vmatpush.xpose.msra.mxu0 0.0
          %662 = vmatpush.xpose.msra.mxu0 0.0
          %663 = vmatpush.xpose.msra.mxu0 0.0
          %664 = vmatpush.xpose.msra.mxu0 0.0
          %665 = vmatpush.xpose.msra.mxu0 0.0
          %666 = vmatpush.xpose.msra.mxu0 0.0
          %667 = vmatpush.xpose.msra.mxu0 0.0
          %668 = vmatpush.xpose.msra.mxu0 0.0
          %669 = vmatpush.xpose.msra.mxu0 0.0
          %670 = vmatpush.xpose.msra.mxu0 0.0
          %671 = vmatpush.xpose.msra.mxu0 0.0
          %672 = vmatpush.xpose.msra.mxu0 0.0
          %673 = vmatpush.xpose.msra.mxu0 0.0
          %674 = vmatpush.xpose.msra.mxu0 %v658
          %675 = vmatpush.xpose.msra.mxu0 %v656
          %676 = vmatmul.f32.gmra.mxu0 %v652
          %v677 = vpop.f32.mrf.mxu0
          %v678 = vadd.f32 0.0, %v677
          %679 = vmatmul.f32.gmra.mxu0 %v654
          %v680 = vpop.f32.mrf.mxu0
          %v681 = vadd.f32 0.0, %v680
          %682 = vdwg.mxu0
          %685 = vrot.lane.b32.xlu0 %v418, 120
          %v686 = vpop.permute.xlu0 %685
          %687 = vrot.lane.b32.xlu0 %v421, 120
          %v688 = vpop.permute.xlu0 %687
          %v689 = vsel %vm429, %v418, 0
          %v691 = vsel %vm429, %v421, 0
          %v693 = vsel %vm429, %v686, 0
          %v695 = vsel %vm429, %v688, 0
          %697 = vmatpush.xpose.msra.mxu0 0.0
          %698 = vmatpush.xpose.msra.mxu0 0.0
          %699 = vmatpush.xpose.msra.mxu0 0.0
          %700 = vmatpush.xpose.msra.mxu0 0.0
          %701 = vmatpush.xpose.msra.mxu0 0.0
          %702 = vmatpush.xpose.msra.mxu0 0.0
          %703 = vmatpush.xpose.msra.mxu0 0.0
          %704 = vmatpush.xpose.msra.mxu0 0.0
          %705 = vmatpush.xpose.msra.mxu0 0.0
          %706 = vmatpush.xpose.msra.mxu0 0.0
          %707 = vmatpush.xpose.msra.mxu0 0.0
          %708 = vmatpush.xpose.msra.mxu0 0.0
          %709 = vmatpush.xpose.msra.mxu0 0.0
          %710 = vmatpush.xpose.msra.mxu0 0.0
          %711 = vmatpush.xpose.msra.mxu0 %v695
          %712 = vmatpush.xpose.msra.mxu0 %v693
          %713 = vmatmul.f32.gmra.mxu0 %v689
          %v714 = vpop.f32.mrf.mxu0
          %v715 = vadd.f32 0.0, %v714
          %716 = vmatmul.f32.gmra.mxu0 %v691
          %v717 = vpop.f32.mrf.mxu0
          %v718 = vadd.f32 0.0, %v717
          %719 = vdwg.mxu0
          %v720 = vmul.f32 %v456, 0.5
          %v721 = vmul.f32 %v459, 0.5
          %v722 = vmul.f32 %v493, 0.5
          %v723 = vmul.f32 %v496, 0.5
          %v724 = vmul.f32 %v530, 0.5
          %v725 = vmul.f32 %v533, 0.5
          %v726 = vmul.f32 %v567, 0.5
          %v727 = vmul.f32 %v570, 0.5
          %v728 = vmul.f32 %v604, 0.5
          %v729 = vmul.f32 %v607, 0.5
          %v730 = vmul.f32 %v641, 0.5
          %v731 = vmul.f32 %v644, 0.5
          %v732 = vmul.f32 %v678, 0.5
          %v733 = vmul.f32 %v681, 0.5
          %v734 = vmul.f32 %v715, 0.5
          %v735 = vmul.f32 %v718, 0.5
          %vm736 = vcmask 130048
          %v737 = vsel %vm736, %v720, -inf
          %738 = vmax.xlane.f32.xlu0 %v737
          %v739 = vpop.xlane.xlu0 %738
          %v740 = vsel %vm736, %v721, -inf
          %741 = vmax.xlane.f32.xlu0 %v740
          %v742 = vpop.xlane.xlu0 %741
          %v743 = vsel %vm736, %v722, -inf
          %744 = vmax.xlane.f32.xlu0 %v743
          %v745 = vpop.xlane.xlu0 %744
          %v746 = vsel %vm736, %v723, -inf
          %747 = vmax.xlane.f32.xlu0 %v746
          %v748 = vpop.xlane.xlu0 %747
          %v749 = vsel %vm736, %v724, -inf
          %750 = vmax.xlane.f32.xlu0 %v749
          %v751 = vpop.xlane.xlu0 %750
          %v752 = vsel %vm736, %v725, -inf
          %753 = vmax.xlane.f32.xlu0 %v752
          %v754 = vpop.xlane.xlu0 %753
          %v755 = vsel %vm736, %v726, -inf
          %756 = vmax.xlane.f32.xlu0 %v755
          %v757 = vpop.xlane.xlu0 %756
          %v758 = vsel %vm736, %v727, -inf
          %759 = vmax.xlane.f32.xlu0 %v758
          %v760 = vpop.xlane.xlu0 %759
          %v761 = vsel %vm736, %v728, -inf
          %762 = vmax.xlane.f32.xlu0 %v761
          %v763 = vpop.xlane.xlu0 %762
          %v764 = vsel %vm736, %v729, -inf
          %765 = vmax.xlane.f32.xlu0 %v764
          %v766 = vpop.xlane.xlu0 %765
          %v767 = vsel %vm736, %v730, -inf
          %768 = vmax.xlane.f32.xlu0 %v767
          %v769 = vpop.xlane.xlu0 %768
          %v770 = vsel %vm736, %v731, -inf
          %771 = vmax.xlane.f32.xlu0 %v770
          %v772 = vpop.xlane.xlu0 %771
          %v773 = vsel %vm736, %v732, -inf
          %774 = vmax.xlane.f32.xlu0 %v773
          %v775 = vpop.xlane.xlu0 %774
          %v776 = vsel %vm736, %v733, -inf
          %777 = vmax.xlane.f32.xlu0 %v776
          %v778 = vpop.xlane.xlu0 %777
          %v779 = vsel %vm736, %v734, -inf
          %780 = vmax.xlane.f32.xlu0 %v779
          %v781 = vpop.xlane.xlu0 %780
          %v782 = vsel %vm736, %v735, -inf
          %783 = vmax.xlane.f32.xlu0 %v782
          %v784 = vpop.xlane.xlu0 %783
          %v785 = vsub.f32 %v720, %v739
          %v786 = vsub.f32 %v721, %v742
          %v787 = vsub.f32 %v722, %v745
          %v788 = vsub.f32 %v723, %v748
          %v789 = vsub.f32 %v724, %v751
          %v790 = vsub.f32 %v725, %v754
          %v791 = vsub.f32 %v726, %v757
          %v792 = vsub.f32 %v727, %v760
          %v793 = vsub.f32 %v728, %v763
          %v794 = vsub.f32 %v729, %v766
          %v795 = vsub.f32 %v730, %v769
          %v796 = vsub.f32 %v731, %v772
          %v797 = vsub.f32 %v732, %v775
          %v798 = vsub.f32 %v733, %v778
          %v799 = vsub.f32 %v734, %v781
          %v800 = vsub.f32 %v735, %v784
          %v801 = vmul.f32 %v785, 1.442695
          %v802 = vpow.pop %v801
          %v803 = vmul.f32 %v786, 1.442695
          %v804 = vpow.pop %v803
          %v805 = vmul.f32 %v787, 1.442695
          %v806 = vpow.pop %v805
          %v807 = vmul.f32 %v788, 1.442695
          %v808 = vpow.pop %v807
          %v809 = vmul.f32 %v789, 1.442695
          %v810 = vpow.pop %v809
          %v811 = vmul.f32 %v790, 1.442695
          %v812 = vpow.pop %v811
          %v813 = vmul.f32 %v791, 1.442695
          %v814 = vpow.pop %v813
          %v815 = vmul.f32 %v792, 1.442695
          %v816 = vpow.pop %v815
          %v817 = vmul.f32 %v793, 1.442695
          %v818 = vpow.pop %v817
          %v819 = vmul.f32 %v794, 1.442695
          %v820 = vpow.pop %v819
          %v821 = vmul.f32 %v795, 1.442695
          %v822 = vpow.pop %v821
          %v823 = vmul.f32 %v796, 1.442695
          %v824 = vpow.pop %v823
          %v825 = vmul.f32 %v797, 1.442695
          %v826 = vpow.pop %v825
          %v827 = vmul.f32 %v798, 1.442695
          %v828 = vpow.pop %v827
          %v829 = vmul.f32 %v799, 1.442695
          %v830 = vpow.pop %v829
          %v831 = vmul.f32 %v800, 1.442695
          %v832 = vpow.pop %v831
          %v833 = vsel %vm736, %v802, 0.0
          %834 = vadd.xlane.f32.xlu0 %v833
          %v835 = vpop.xlane.xlu0 %834
          %v836 = vsel %vm736, %v804, 0.0
          %837 = vadd.xlane.f32.xlu0 %v836
          %v838 = vpop.xlane.xlu0 %837
          %v839 = vsel %vm736, %v806, 0.0
          %840 = vadd.xlane.f32.xlu0 %v839
          %v841 = vpop.xlane.xlu0 %840
          %v842 = vsel %vm736, %v808, 0.0
          %843 = vadd.xlane.f32.xlu0 %v842
          %v844 = vpop.xlane.xlu0 %843
          %v845 = vsel %vm736, %v810, 0.0
          %846 = vadd.xlane.f32.xlu0 %v845
          %v847 = vpop.xlane.xlu0 %846
          %v848 = vsel %vm736, %v812, 0.0
          %849 = vadd.xlane.f32.xlu0 %v848
          %v850 = vpop.xlane.xlu0 %849
          %v851 = vsel %vm736, %v814, 0.0
          %852 = vadd.xlane.f32.xlu0 %v851
          %v853 = vpop.xlane.xlu0 %852
          %v854 = vsel %vm736, %v816, 0.0
          %855 = vadd.xlane.f32.xlu0 %v854
          %v856 = vpop.xlane.xlu0 %855
          %v857 = vsel %vm736, %v818, 0.0
          %858 = vadd.xlane.f32.xlu0 %v857
          %v859 = vpop.xlane.xlu0 %858
          %v860 = vsel %vm736, %v820, 0.0
          %861 = vadd.xlane.f32.xlu0 %v860
          %v862 = vpop.xlane.xlu0 %861
          %v863 = vsel %vm736, %v822, 0.0
          %864 = vadd.xlane.f32.xlu0 %v863
          %v865 = vpop.xlane.xlu0 %864
          %v866 = vsel %vm736, %v824, 0.0
          %867 = vadd.xlane.f32.xlu0 %v866
          %v868 = vpop.xlane.xlu0 %867
          %v869 = vsel %vm736, %v826, 0.0
          %870 = vadd.xlane.f32.xlu0 %v869
          %v871 = vpop.xlane.xlu0 %870
          %v872 = vsel %vm736, %v828, 0.0
          %873 = vadd.xlane.f32.xlu0 %v872
          %v874 = vpop.xlane.xlu0 %873
          %v875 = vsel %vm736, %v830, 0.0
          %876 = vadd.xlane.f32.xlu0 %v875
          %v877 = vpop.xlane.xlu0 %876
          %v878 = vsel %vm736, %v832, 0.0
          %879 = vadd.xlane.f32.xlu0 %v878
          %v880 = vpop.xlane.xlu0 %879
          %v881 = vrcp.pop %v835
          %v882 = vmul.f32 %v835, %v881
          %v883 = vsub.f32 1.0, %v882
          %v884 = vmul.f32 %v881, %v883
          %v885 = vadd.f32 %v881, %v884
          %vm886 = vweird.f32 %v835
          %vm887 = vweird.f32 %v881
          %vm888 = vmor %vm886, %vm887
          %v889 = vsel %vm888, %v881, %v885
          %v890 = vand.u32 2147483647, %v835
          %vm891 = vcmp.eq.f32.partialorder %v890, 8.507059e+37
          %v892 = vand.u32 %v835, 2147483648
          %v893 = vor.u32 1.1754944e-38, %v892
          %v894 = vsel %vm891, %v893, %v889
          %v895 = vmul.f32 %v802, %v894
          %v896 = vrcp.pop %v838
          %v897 = vmul.f32 %v838, %v896
          %v898 = vsub.f32 1.0, %v897
          %v899 = vmul.f32 %v896, %v898
          %v900 = vadd.f32 %v896, %v899
          %vm901 = vweird.f32 %v838
          %vm902 = vweird.f32 %v896
          %vm903 = vmor %vm901, %vm902
          %v904 = vsel %vm903, %v896, %v900
          %v905 = vand.u32 2147483647, %v838
          %vm906 = vcmp.eq.f32.partialorder %v905, 8.507059e+37
          %v907 = vand.u32 %v838, 2147483648
          %v908 = vor.u32 1.1754944e-38, %v907
          %v909 = vsel %vm906, %v908, %v904
          %v910 = vmul.f32 %v804, %v909
          %v911 = vrcp.pop %v841
          %v912 = vmul.f32 %v841, %v911
          %v913 = vsub.f32 1.0, %v912
          %v914 = vmul.f32 %v911, %v913
          %v915 = vadd.f32 %v911, %v914
          %vm916 = vweird.f32 %v841
          %vm917 = vweird.f32 %v911
          %vm918 = vmor %vm916, %vm917
          %v919 = vsel %vm918, %v911, %v915
          %v920 = vand.u32 2147483647, %v841
          %vm921 = vcmp.eq.f32.partialorder %v920, 8.507059e+37
          %v922 = vand.u32 %v841, 2147483648
          %v923 = vor.u32 1.1754944e-38, %v922
          %v924 = vsel %vm921, %v923, %v919
          %v925 = vmul.f32 %v806, %v924
          %v926 = vrcp.pop %v844
          %v927 = vmul.f32 %v844, %v926
          %v928 = vsub.f32 1.0, %v927
          %v929 = vmul.f32 %v926, %v928
          %v930 = vadd.f32 %v926, %v929
          %vm931 = vweird.f32 %v844
          %vm932 = vweird.f32 %v926
          %vm933 = vmor %vm931, %vm932
          %v934 = vsel %vm933, %v926, %v930
          %v935 = vand.u32 2147483647, %v844
          %vm936 = vcmp.eq.f32.partialorder %v935, 8.507059e+37
          %v937 = vand.u32 %v844, 2147483648
          %v938 = vor.u32 1.1754944e-38, %v937
          %v939 = vsel %vm936, %v938, %v934
          %v940 = vmul.f32 %v808, %v939
          %v941 = vrcp.pop %v847
          %v942 = vmul.f32 %v847, %v941
          %v943 = vsub.f32 1.0, %v942
          %v944 = vmul.f32 %v941, %v943
          %v945 = vadd.f32 %v941, %v944
          %vm946 = vweird.f32 %v847
          %vm947 = vweird.f32 %v941
          %vm948 = vmor %vm946, %vm947
          %v949 = vsel %vm948, %v941, %v945
          %v950 = vand.u32 2147483647, %v847
          %vm951 = vcmp.eq.f32.partialorder %v950, 8.507059e+37
          %v952 = vand.u32 %v847, 2147483648
          %v953 = vor.u32 1.1754944e-38, %v952
          %v954 = vsel %vm951, %v953, %v949
          %v955 = vmul.f32 %v810, %v954
          %v956 = vrcp.pop %v850
          %v957 = vmul.f32 %v850, %v956
          %v958 = vsub.f32 1.0, %v957
          %v959 = vmul.f32 %v956, %v958
          %v960 = vadd.f32 %v956, %v959
          %vm961 = vweird.f32 %v850
          %vm962 = vweird.f32 %v956
          %vm963 = vmor %vm961, %vm962
          %v964 = vsel %vm963, %v956, %v960
          %v965 = vand.u32 2147483647, %v850
          %vm966 = vcmp.eq.f32.partialorder %v965, 8.507059e+37
          %v967 = vand.u32 %v850, 2147483648
          %v968 = vor.u32 1.1754944e-38, %v967
          %v969 = vsel %vm966, %v968, %v964
          %v970 = vmul.f32 %v812, %v969
          %v971 = vrcp.pop %v853
          %v972 = vmul.f32 %v853, %v971
          %v973 = vsub.f32 1.0, %v972
          %v974 = vmul.f32 %v971, %v973
          %v975 = vadd.f32 %v971, %v974
          %vm976 = vweird.f32 %v853
          %vm977 = vweird.f32 %v971
          %vm978 = vmor %vm976, %vm977
          %v979 = vsel %vm978, %v971, %v975
          %v980 = vand.u32 2147483647, %v853
          %vm981 = vcmp.eq.f32.partialorder %v980, 8.507059e+37
          %v982 = vand.u32 %v853, 2147483648
          %v983 = vor.u32 1.1754944e-38, %v982
          %v984 = vsel %vm981, %v983, %v979
          %v985 = vmul.f32 %v814, %v984
          %v986 = vrcp.pop %v856
          %v987 = vmul.f32 %v856, %v986
          %v988 = vsub.f32 1.0, %v987
          %v989 = vmul.f32 %v986, %v988
          %v990 = vadd.f32 %v986, %v989
          %vm991 = vweird.f32 %v856
          %vm992 = vweird.f32 %v986
          %vm993 = vmor %vm991, %vm992
          %v994 = vsel %vm993, %v986, %v990
          %v995 = vand.u32 2147483647, %v856
          %vm996 = vcmp.eq.f32.partialorder %v995, 8.507059e+37
          %v997 = vand.u32 %v856, 2147483648
          %v998 = vor.u32 1.1754944e-38, %v997
          %v999 = vsel %vm996, %v998, %v994
          %v1000 = vmul.f32 %v816, %v999
          %v1001 = vrcp.pop %v859
          %v1002 = vmul.f32 %v859, %v1001
          %v1003 = vsub.f32 1.0, %v1002
          %v1004 = vmul.f32 %v1001, %v1003
          %v1005 = vadd.f32 %v1001, %v1004
          %vm1006 = vweird.f32 %v859
          %vm1007 = vweird.f32 %v1001
          %vm1008 = vmor %vm1006, %vm1007
          %v1009 = vsel %vm1008, %v1001, %v1005
          %v1010 = vand.u32 2147483647, %v859
          %vm1011 = vcmp.eq.f32.partialorder %v1010, 8.507059e+37
          %v1012 = vand.u32 %v859, 2147483648
          %v1013 = vor.u32 1.1754944e-38, %v1012
          %v1014 = vsel %vm1011, %v1013, %v1009
          %v1015 = vmul.f32 %v818, %v1014
          %v1016 = vrcp.pop %v862
          %v1017 = vmul.f32 %v862, %v1016
          %v1018 = vsub.f32 1.0, %v1017
          %v1019 = vmul.f32 %v1016, %v1018
          %v1020 = vadd.f32 %v1016, %v1019
          %vm1021 = vweird.f32 %v862
          %vm1022 = vweird.f32 %v1016
          %vm1023 = vmor %vm1021, %vm1022
          %v1024 = vsel %vm1023, %v1016, %v1020
          %v1025 = vand.u32 2147483647, %v862
          %vm1026 = vcmp.eq.f32.partialorder %v1025, 8.507059e+37
          %v1027 = vand.u32 %v862, 2147483648
          %v1028 = vor.u32 1.1754944e-38, %v1027
          %v1029 = vsel %vm1026, %v1028, %v1024
          %v1030 = vmul.f32 %v820, %v1029
          %v1031 = vrcp.pop %v865
          %v1032 = vmul.f32 %v865, %v1031
          %v1033 = vsub.f32 1.0, %v1032
          %v1034 = vmul.f32 %v1031, %v1033
          %v1035 = vadd.f32 %v1031, %v1034
          %vm1036 = vweird.f32 %v865
          %vm1037 = vweird.f32 %v1031
          %vm1038 = vmor %vm1036, %vm1037
          %v1039 = vsel %vm1038, %v1031, %v1035
          %v1040 = vand.u32 2147483647, %v865
          %vm1041 = vcmp.eq.f32.partialorder %v1040, 8.507059e+37
          %v1042 = vand.u32 %v865, 2147483648
          %v1043 = vor.u32 1.1754944e-38, %v1042
          %v1044 = vsel %vm1041, %v1043, %v1039
          %v1045 = vmul.f32 %v822, %v1044
          %v1046 = vrcp.pop %v868
          %v1047 = vmul.f32 %v868, %v1046
          %v1048 = vsub.f32 1.0, %v1047
          %v1049 = vmul.f32 %v1046, %v1048
          %v1050 = vadd.f32 %v1046, %v1049
          %vm1051 = vweird.f32 %v868
          %vm1052 = vweird.f32 %v1046
          %vm1053 = vmor %vm1051, %vm1052
          %v1054 = vsel %vm1053, %v1046, %v1050
          %v1055 = vand.u32 2147483647, %v868
          %vm1056 = vcmp.eq.f32.partialorder %v1055, 8.507059e+37
          %v1057 = vand.u32 %v868, 2147483648
          %v1058 = vor.u32 1.1754944e-38, %v1057
          %v1059 = vsel %vm1056, %v1058, %v1054
          %v1060 = vmul.f32 %v824, %v1059
          %v1061 = vrcp.pop %v871
          %v1062 = vmul.f32 %v871, %v1061
          %v1063 = vsub.f32 1.0, %v1062
          %v1064 = vmul.f32 %v1061, %v1063
          %v1065 = vadd.f32 %v1061, %v1064
          %vm1066 = vweird.f32 %v871
          %vm1067 = vweird.f32 %v1061
          %vm1068 = vmor %vm1066, %vm1067
          %v1069 = vsel %vm1068, %v1061, %v1065
          %v1070 = vand.u32 2147483647, %v871
          %vm1071 = vcmp.eq.f32.partialorder %v1070, 8.507059e+37
          %v1072 = vand.u32 %v871, 2147483648
          %v1073 = vor.u32 1.1754944e-38, %v1072
          %v1074 = vsel %vm1071, %v1073, %v1069
          %v1075 = vmul.f32 %v826, %v1074
          %v1076 = vrcp.pop %v874
          %v1077 = vmul.f32 %v874, %v1076
          %v1078 = vsub.f32 1.0, %v1077
          %v1079 = vmul.f32 %v1076, %v1078
          %v1080 = vadd.f32 %v1076, %v1079
          %vm1081 = vweird.f32 %v874
          %vm1082 = vweird.f32 %v1076
          %vm1083 = vmor %vm1081, %vm1082
          %v1084 = vsel %vm1083, %v1076, %v1080
          %v1085 = vand.u32 2147483647, %v874
          %vm1086 = vcmp.eq.f32.partialorder %v1085, 8.507059e+37
          %v1087 = vand.u32 %v874, 2147483648
          %v1088 = vor.u32 1.1754944e-38, %v1087
          %v1089 = vsel %vm1086, %v1088, %v1084
          %v1090 = vmul.f32 %v828, %v1089
          %v1091 = vrcp.pop %v877
          %v1092 = vmul.f32 %v877, %v1091
          %v1093 = vsub.f32 1.0, %v1092
          %v1094 = vmul.f32 %v1091, %v1093
          %v1095 = vadd.f32 %v1091, %v1094
          %vm1096 = vweird.f32 %v877
          %vm1097 = vweird.f32 %v1091
          %vm1098 = vmor %vm1096, %vm1097
          %v1099 = vsel %vm1098, %v1091, %v1095
          %v1100 = vand.u32 2147483647, %v877
          %vm1101 = vcmp.eq.f32.partialorder %v1100, 8.507059e+37
          %v1102 = vand.u32 %v877, 2147483648
          %v1103 = vor.u32 1.1754944e-38, %v1102
          %v1104 = vsel %vm1101, %v1103, %v1099
          %v1105 = vmul.f32 %v830, %v1104
          %v1106 = vrcp.pop %v880
          %v1107 = vmul.f32 %v880, %v1106
          %v1108 = vsub.f32 1.0, %v1107
          %v1109 = vmul.f32 %v1106, %v1108
          %v1110 = vadd.f32 %v1106, %v1109
          %vm1111 = vweird.f32 %v880
          %vm1112 = vweird.f32 %v1106
          %vm1113 = vmor %vm1111, %vm1112
          %v1114 = vsel %vm1113, %v1106, %v1110
          %v1115 = vand.u32 2147483647, %v880
          %vm1116 = vcmp.eq.f32.partialorder %v1115, 8.507059e+37
          %v1117 = vand.u32 %v880, 2147483648
          %v1118 = vor.u32 1.1754944e-38, %v1117
          %v1119 = vsel %vm1116, %v1118, %v1114
          %v1120 = vmul.f32 %v832, %v1119
          %1121 = vrot.lane.b32.xlu0 %v376, 112
          %v1122 = vpop.permute.xlu0 %1121
          %1123 = vrot.lane.b32.xlu0 %v379, 112
          %v1124 = vpop.permute.xlu0 %1123
          %v1128 = vsel %vm736, %v895, 0
          %v1131 = vsel %vm736, %v910, 0
          %1133 = vmatpush.msra.mxu0 0.0
          %1134 = vmatpush.msra.mxu0 0.0
          %1135 = vmatpush.msra.mxu0 0.0
          %1136 = vmatpush.msra.mxu0 0.0
          %1137 = vmatpush.msra.mxu0 0.0
          %1138 = vmatpush.msra.mxu0 0.0
          %1139 = vmatpush.msra.mxu0 0.0
          %1140 = vmatpush.msra.mxu0 0.0
          %1141 = vmatpush.msra.mxu0 0.0
          %1142 = vmatpush.msra.mxu0 0.0
          %1143 = vmatpush.msra.mxu0 0.0
          %1144 = vmatpush.msra.mxu0 0.0
          %1145 = vmatpush.msra.mxu0 0.0
          %1146 = vmatpush.msra.mxu0 0.0
          %1147 = vmatpush.msra.mxu0 %v1124
          %1148 = vmatpush.msra.mxu0 %v1122
          %1149 = vmatmul.f32.gmra.mxu0 %v1128
          %v1150 = vpop.f32.mrf.mxu0
          %v1151 = vadd.f32 0.0, %v1150
          %1152 = vmatmul.f32.gmra.mxu0 %v1131
          %v1153 = vpop.f32.mrf.mxu0
          %v1154 = vadd.f32 0.0, %v1153
          %1155 = vdwg.mxu0
          %1156 = vrot.lane.b32.xlu0 %v382, 112
          %v1157 = vpop.permute.xlu0 %1156
          %1158 = vrot.lane.b32.xlu0 %v385, 112
          %v1159 = vpop.permute.xlu0 %1158
          %v1163 = vsel %vm736, %v925, 0
          %v1166 = vsel %vm736, %v940, 0
          %1168 = vmatpush.msra.mxu0 0.0
          %1169 = vmatpush.msra.mxu0 0.0
          %1170 = vmatpush.msra.mxu0 0.0
          %1171 = vmatpush.msra.mxu0 0.0
          %1172 = vmatpush.msra.mxu0 0.0
          %1173 = vmatpush.msra.mxu0 0.0
          %1174 = vmatpush.msra.mxu0 0.0
          %1175 = vmatpush.msra.mxu0 0.0
          %1176 = vmatpush.msra.mxu0 0.0
          %1177 = vmatpush.msra.mxu0 0.0
          %1178 = vmatpush.msra.mxu0 0.0
          %1179 = vmatpush.msra.mxu0 0.0
          %1180 = vmatpush.msra.mxu0 0.0
          %1181 = vmatpush.msra.mxu0 0.0
          %1182 = vmatpush.msra.mxu0 %v1159
          %1183 = vmatpush.msra.mxu0 %v1157
          %1184 = vmatmul.f32.gmra.mxu0 %v1163
          %v1185 = vpop.f32.mrf.mxu0
          %v1186 = vadd.f32 0.0, %v1185
          %1187 = vmatmul.f32.gmra.mxu0 %v1166
          %v1188 = vpop.f32.mrf.mxu0
          %v1189 = vadd.f32 0.0, %v1188
          %1190 = vdwg.mxu0
          %1191 = vrot.lane.b32.xlu0 %v388, 112
          %v1192 = vpop.permute.xlu0 %1191
          %1193 = vrot.lane.b32.xlu0 %v391, 112
          %v1194 = vpop.permute.xlu0 %1193
          %v1198 = vsel %vm736, %v955, 0
          %v1201 = vsel %vm736, %v970, 0
          %1203 = vmatpush.msra.mxu0 0.0
          %1204 = vmatpush.msra.mxu0 0.0
          %1205 = vmatpush.msra.mxu0 0.0
          %1206 = vmatpush.msra.mxu0 0.0
          %1207 = vmatpush.msra.mxu0 0.0
          %1208 = vmatpush.msra.mxu0 0.0
          %1209 = vmatpush.msra.mxu0 0.0
          %1210 = vmatpush.msra.mxu0 0.0
          %1211 = vmatpush.msra.mxu0 0.0
          %1212 = vmatpush.msra.mxu0 0.0
          %1213 = vmatpush.msra.mxu0 0.0
          %1214 = vmatpush.msra.mxu0 0.0
          %1215 = vmatpush.msra.mxu0 0.0
          %1216 = vmatpush.msra.mxu0 0.0
          %1217 = vmatpush.msra.mxu0 %v1194
          %1218 = vmatpush.msra.mxu0 %v1192
          %1219 = vmatmul.f32.gmra.mxu0 %v1198
          %v1220 = vpop.f32.mrf.mxu0
          %v1221 = vadd.f32 0.0, %v1220
          %1222 = vmatmul.f32.gmra.mxu0 %v1201
          %v1223 = vpop.f32.mrf.mxu0
          %v1224 = vadd.f32 0.0, %v1223
          %1225 = vdwg.mxu0
          %1226 = vrot.lane.b32.xlu0 %v394, 112
          %v1227 = vpop.permute.xlu0 %1226
          %1228 = vrot.lane.b32.xlu0 %v397, 112
          %v1229 = vpop.permute.xlu0 %1228
          %v1233 = vsel %vm736, %v985, 0
          %v1236 = vsel %vm736, %v1000, 0
          %1238 = vmatpush.msra.mxu0 0.0
          %1239 = vmatpush.msra.mxu0 0.0
          %1240 = vmatpush.msra.mxu0 0.0
          %1241 = vmatpush.msra.mxu0 0.0
          %1242 = vmatpush.msra.mxu0 0.0
          %1243 = vmatpush.msra.mxu0 0.0
          %1244 = vmatpush.msra.mxu0 0.0
          %1245 = vmatpush.msra.mxu0 0.0
          %1246 = vmatpush.msra.mxu0 0.0
          %1247 = vmatpush.msra.mxu0 0.0
          %1248 = vmatpush.msra.mxu0 0.0
          %1249 = vmatpush.msra.mxu0 0.0
          %1250 = vmatpush.msra.mxu0 0.0
          %1251 = vmatpush.msra.mxu0 0.0
          %1252 = vmatpush.msra.mxu0 %v1229
          %1253 = vmatpush.msra.mxu0 %v1227
          %1254 = vmatmul.f32.gmra.mxu0 %v1233
          %v1255 = vpop.f32.mrf.mxu0
          %v1256 = vadd.f32 0.0, %v1255
          %1257 = vmatmul.f32.gmra.mxu0 %v1236
          %v1258 = vpop.f32.mrf.mxu0
          %v1259 = vadd.f32 0.0, %v1258
          %1260 = vdwg.mxu0
          %1261 = vrot.lane.b32.xlu0 %v400, 112
          %v1262 = vpop.permute.xlu0 %1261
          %1263 = vrot.lane.b32.xlu0 %v403, 112
          %v1264 = vpop.permute.xlu0 %1263
          %v1268 = vsel %vm736, %v1015, 0
          %v1271 = vsel %vm736, %v1030, 0
          %1273 = vmatpush.msra.mxu0 0.0
          %1274 = vmatpush.msra.mxu0 0.0
          %1275 = vmatpush.msra.mxu0 0.0
          %1276 = vmatpush.msra.mxu0 0.0
          %1277 = vmatpush.msra.mxu0 0.0
          %1278 = vmatpush.msra.mxu0 0.0
          %1279 = vmatpush.msra.mxu0 0.0
          %1280 = vmatpush.msra.mxu0 0.0
          %1281 = vmatpush.msra.mxu0 0.0
          %1282 = vmatpush.msra.mxu0 0.0
          %1283 = vmatpush.msra.mxu0 0.0
          %1284 = vmatpush.msra.mxu0 0.0
          %1285 = vmatpush.msra.mxu0 0.0
          %1286 = vmatpush.msra.mxu0 0.0
          %1287 = vmatpush.msra.mxu0 %v1264
          %1288 = vmatpush.msra.mxu0 %v1262
          %1289 = vmatmul.f32.gmra.mxu0 %v1268
          %v1290 = vpop.f32.mrf.mxu0
          %v1291 = vadd.f32 0.0, %v1290
          %1292 = vmatmul.f32.gmra.mxu0 %v1271
          %v1293 = vpop.f32.mrf.mxu0
          %v1294 = vadd.f32 0.0, %v1293
          %1295 = vdwg.mxu0
          %1296 = vrot.lane.b32.xlu0 %v406, 112
          %v1297 = vpop.permute.xlu0 %1296
          %1298 = vrot.lane.b32.xlu0 %v409, 112
          %v1299 = vpop.permute.xlu0 %1298
          %v1303 = vsel %vm736, %v1045, 0
          %v1306 = vsel %vm736, %v1060, 0
          %1308 = vmatpush.msra.mxu0 0.0
          %1309 = vmatpush.msra.mxu0 0.0
          %1310 = vmatpush.msra.mxu0 0.0
          %1311 = vmatpush.msra.mxu0 0.0
          %1312 = vmatpush.msra.mxu0 0.0
          %1313 = vmatpush.msra.mxu0 0.0
          %1314 = vmatpush.msra.mxu0 0.0
          %1315 = vmatpush.msra.mxu0 0.0
          %1316 = vmatpush.msra.mxu0 0.0
          %1317 = vmatpush.msra.mxu0 0.0
          %1318 = vmatpush.msra.mxu0 0.0
          %1319 = vmatpush.msra.mxu0 0.0
          %1320 = vmatpush.msra.mxu0 0.0
          %1321 = vmatpush.msra.mxu0 0.0
          %1322 = vmatpush.msra.mxu0 %v1299
          %1323 = vmatpush.msra.mxu0 %v1297
          %1324 = vmatmul.f32.gmra.mxu0 %v1303
          %v1325 = vpop.f32.mrf.mxu0
          %v1326 = vadd.f32 0.0, %v1325
          %1327 = vmatmul.f32.gmra.mxu0 %v1306
          %v1328 = vpop.f32.mrf.mxu0
          %v1329 = vadd.f32 0.0, %v1328
          %1330 = vdwg.mxu0
          %1331 = vrot.lane.b32.xlu0 %v412, 112
          %v1332 = vpop.permute.xlu0 %1331
          %1333 = vrot.lane.b32.xlu0 %v415, 112
          %v1334 = vpop.permute.xlu0 %1333
          %v1338 = vsel %vm736, %v1075, 0
          %v1341 = vsel %vm736, %v1090, 0
          %1343 = vmatpush.msra.mxu0 0.0
          %1344 = vmatpush.msra.mxu0 0.0
          %1345 = vmatpush.msra.mxu0 0.0
          %1346 = vmatpush.msra.mxu0 0.0
          %1347 = vmatpush.msra.mxu0 0.0
          %1348 = vmatpush.msra.mxu0 0.0
          %1349 = vmatpush.msra.mxu0 0.0
          %1350 = vmatpush.msra.mxu0 0.0
          %1351 = vmatpush.msra.mxu0 0.0
          %1352 = vmatpush.msra.mxu0 0.0
          %1353 = vmatpush.msra.mxu0 0.0
          %1354 = vmatpush.msra.mxu0 0.0
          %1355 = vmatpush.msra.mxu0 0.0
          %1356 = vmatpush.msra.mxu0 0.0
          %1357 = vmatpush.msra.mxu0 %v1334
          %1358 = vmatpush.msra.mxu0 %v1332
          %1359 = vmatmul.f32.gmra.mxu0 %v1338
          %v1360 = vpop.f32.mrf.mxu0
          %v1361 = vadd.f32 0.0, %v1360
          %1362 = vmatmul.f32.gmra.mxu0 %v1341
          %v1363 = vpop.f32.mrf.mxu0
          %v1364 = vadd.f32 0.0, %v1363
          %1365 = vdwg.mxu0
          %1366 = vrot.lane.b32.xlu0 %v418, 112
          %v1367 = vpop.permute.xlu0 %1366
          %1368 = vrot.lane.b32.xlu0 %v421, 112
          %v1369 = vpop.permute.xlu0 %1368
          %v1373 = vsel %vm736, %v1105, 0
          %v1376 = vsel %vm736, %v1120, 0
          %1378 = vmatpush.msra.mxu0 0.0
          %1379 = vmatpush.msra.mxu0 0.0
          %1380 = vmatpush.msra.mxu0 0.0
          %1381 = vmatpush.msra.mxu0 0.0
          %1382 = vmatpush.msra.mxu0 0.0
          %1383 = vmatpush.msra.mxu0 0.0
          %1384 = vmatpush.msra.mxu0 0.0
          %1385 = vmatpush.msra.mxu0 0.0
          %1386 = vmatpush.msra.mxu0 0.0
          %1387 = vmatpush.msra.mxu0 0.0
          %1388 = vmatpush.msra.mxu0 0.0
          %1389 = vmatpush.msra.mxu0 0.0
          %1390 = vmatpush.msra.mxu0 0.0
          %1391 = vmatpush.msra.mxu0 0.0
          %1392 = vmatpush.msra.mxu0 %v1369
          %1393 = vmatpush.msra.mxu0 %v1367
          %1394 = vmatmul.f32.gmra.mxu0 %v1373
          %v1395 = vpop.f32.mrf.mxu0
          %v1396 = vadd.f32 0.0, %v1395
          %1397 = vmatmul.f32.gmra.mxu0 %v1376
          %v1398 = vpop.f32.mrf.mxu0
          %v1399 = vadd.f32 0.0, %v1398
          %1400 = vdwg.mxu0
          %v1401 = vld [vmem:[%s3] sm:$0xff]
          %1402 = vrot.lane.b32.xlu0 %v376, 124
          %v1403 = vpop.permute.xlu0 %1402
          %1404 = vrot.lane.b32.xlu0 %v379, 124
          %v1405 = vpop.permute.xlu0 %1404
          %1406 = vrot.lane.b32.xlu0 %v376, 116
          %v1407 = vpop.permute.xlu0 %1406
          %1408 = vrot.lane.b32.xlu0 %v379, 116
          %v1409 = vpop.permute.xlu0 %1408
          %v1410 = vsel %vm429, %v1403, 0
          %v1412 = vsel %vm429, %v1405, 0
          %v1414 = vsel %vm429, %v1407, 0
          %v1416 = vsel %vm429, %v1409, 0
          %1418 = vmatpush.xpose.msra.mxu0 0.0
          %1419 = vmatpush.xpose.msra.mxu0 0.0
          %1420 = vmatpush.xpose.msra.mxu0 0.0
          %1421 = vmatpush.xpose.msra.mxu0 0.0
          %1422 = vmatpush.xpose.msra.mxu0 0.0
          %1423 = vmatpush.xpose.msra.mxu0 0.0
          %1424 = vmatpush.xpose.msra.mxu0 0.0
          %1425 = vmatpush.xpose.msra.mxu0 0.0
          %1426 = vmatpush.xpose.msra.mxu0 0.0
          %1427 = vmatpush.xpose.msra.mxu0 0.0
          %1428 = vmatpush.xpose.msra.mxu0 0.0
          %1429 = vmatpush.xpose.msra.mxu0 0.0
          %1430 = vmatpush.xpose.msra.mxu0 0.0
          %1431 = vmatpush.xpose.msra.mxu0 0.0
          %1432 = vmatpush.xpose.msra.mxu0 %v1416
          %1433 = vmatpush.xpose.msra.mxu0 %v1414
          %1434 = vmatmul.f32.gmra.mxu0 %v1410
          %v1435 = vpop.f32.mrf.mxu0
          %v1436 = vadd.f32 0.0, %v1435
          %1437 = vmatmul.f32.gmra.mxu0 %v1412
          %v1438 = vpop.f32.mrf.mxu0
          %v1439 = vadd.f32 0.0, %v1438
          %1440 = vdwg.mxu0
          %1441 = vrot.lane.b32.xlu0 %v382, 124
          %v1442 = vpop.permute.xlu0 %1441
          %1443 = vrot.lane.b32.xlu0 %v385, 124
          %v1444 = vpop.permute.xlu0 %1443
          %1445 = vrot.lane.b32.xlu0 %v382, 116
          %v1446 = vpop.permute.xlu0 %1445
          %1447 = vrot.lane.b32.xlu0 %v385, 116
          %v1448 = vpop.permute.xlu0 %1447
          %v1449 = vsel %vm429, %v1442, 0
          %v1451 = vsel %vm429, %v1444, 0
          %v1453 = vsel %vm429, %v1446, 0
          %v1455 = vsel %vm429, %v1448, 0
          %1457 = vmatpush.xpose.msra.mxu0 0.0
          %1458 = vmatpush.xpose.msra.mxu0 0.0
          %1459 = vmatpush.xpose.msra.mxu0 0.0
          %1460 = vmatpush.xpose.msra.mxu0 0.0
          %1461 = vmatpush.xpose.msra.mxu0 0.0
          %1462 = vmatpush.xpose.msra.mxu0 0.0
          %1463 = vmatpush.xpose.msra.mxu0 0.0
          %1464 = vmatpush.xpose.msra.mxu0 0.0
          %1465 = vmatpush.xpose.msra.mxu0 0.0
          %1466 = vmatpush.xpose.msra.mxu0 0.0
          %1467 = vmatpush.xpose.msra.mxu0 0.0
          %1468 = vmatpush.xpose.msra.mxu0 0.0
          %1469 = vmatpush.xpose.msra.mxu0 0.0
          %1470 = vmatpush.xpose.msra.mxu0 0.0
          %1471 = vmatpush.xpose.msra.mxu0 %v1455
          %1472 = vmatpush.xpose.msra.mxu0 %v1453
          %1473 = vmatmul.f32.gmra.mxu0 %v1449
          %v1474 = vpop.f32.mrf.mxu0
          %v1475 = vadd.f32 0.0, %v1474
          %1476 = vmatmul.f32.gmra.mxu0 %v1451
          %v1477 = vpop.f32.mrf.mxu0
          %v1478 = vadd.f32 0.0, %v1477
          %1479 = vdwg.mxu0
          %1480 = vrot.lane.b32.xlu0 %v388, 124
          %v1481 = vpop.permute.xlu0 %1480
          %1482 = vrot.lane.b32.xlu0 %v391, 124
          %v1483 = vpop.permute.xlu0 %1482
          %1484 = vrot.lane.b32.xlu0 %v388, 116
          %v1485 = vpop.permute.xlu0 %1484
          %1486 = vrot.lane.b32.xlu0 %v391, 116
          %v1487 = vpop.permute.xlu0 %1486
          %v1488 = vsel %vm429, %v1481, 0
          %v1490 = vsel %vm429, %v1483, 0
          %v1492 = vsel %vm429, %v1485, 0
          %v1494 = vsel %vm429, %v1487, 0
          %1496 = vmatpush.xpose.msra.mxu0 0.0
          %1497 = vmatpush.xpose.msra.mxu0 0.0
          %1498 = vmatpush.xpose.msra.mxu0 0.0
          %1499 = vmatpush.xpose.msra.mxu0 0.0
          %1500 = vmatpush.xpose.msra.mxu0 0.0
          %1501 = vmatpush.xpose.msra.mxu0 0.0
          %1502 = vmatpush.xpose.msra.mxu0 0.0
          %1503 = vmatpush.xpose.msra.mxu0 0.0
          %1504 = vmatpush.xpose.msra.mxu0 0.0
          %1505 = vmatpush.xpose.msra.mxu0 0.0
          %1506 = vmatpush.xpose.msra.mxu0 0.0
          %1507 = vmatpush.xpose.msra.mxu0 0.0
          %1508 = vmatpush.xpose.msra.mxu0 0.0
          %1509 = vmatpush.xpose.msra.mxu0 0.0
          %1510 = vmatpush.xpose.msra.mxu0 %v1494
          %1511 = vmatpush.xpose.msra.mxu0 %v1492
          %1512 = vmatmul.f32.gmra.mxu0 %v1488
          %v1513 = vpop.f32.mrf.mxu0
          %v1514 = vadd.f32 0.0, %v1513
          %1515 = vmatmul.f32.gmra.mxu0 %v1490
          %v1516 = vpop.f32.mrf.mxu0
          %v1517 = vadd.f32 0.0, %v1516
          %1518 = vdwg.mxu0
          %1519 = vrot.lane.b32.xlu0 %v394, 124
          %v1520 = vpop.permute.xlu0 %1519
          %1521 = vrot.lane.b32.xlu0 %v397, 124
          %v1522 = vpop.permute.xlu0 %1521
          %1523 = vrot.lane.b32.xlu0 %v394, 116
          %v1524 = vpop.permute.xlu0 %1523
          %1525 = vrot.lane.b32.xlu0 %v397, 116
          %v1526 = vpop.permute.xlu0 %1525
          %v1527 = vsel %vm429, %v1520, 0
          %v1529 = vsel %vm429, %v1522, 0
          %v1531 = vsel %vm429, %v1524, 0
          %v1533 = vsel %vm429, %v1526, 0
          %1535 = vmatpush.xpose.msra.mxu0 0.0
          %1536 = vmatpush.xpose.msra.mxu0 0.0
          %1537 = vmatpush.xpose.msra.mxu0 0.0
          %1538 = vmatpush.xpose.msra.mxu0 0.0
          %1539 = vmatpush.xpose.msra.mxu0 0.0
          %1540 = vmatpush.xpose.msra.mxu0 0.0
          %1541 = vmatpush.xpose.msra.mxu0 0.0
          %1542 = vmatpush.xpose.msra.mxu0 0.0
          %1543 = vmatpush.xpose.msra.mxu0 0.0
          %1544 = vmatpush.xpose.msra.mxu0 0.0
          %1545 = vmatpush.xpose.msra.mxu0 0.0
          %1546 = vmatpush.xpose.msra.mxu0 0.0
          %1547 = vmatpush.xpose.msra.mxu0 0.0
          %1548 = vmatpush.xpose.msra.mxu0 0.0
          %1549 = vmatpush.xpose.msra.mxu0 %v1533
          %1550 = vmatpush.xpose.msra.mxu0 %v1531
          %1551 = vmatmul.f32.gmra.mxu0 %v1527
          %v1552 = vpop.f32.mrf.mxu0
          %v1553 = vadd.f32 0.0, %v1552
          %1554 = vmatmul.f32.gmra.mxu0 %v1529
          %v1555 = vpop.f32.mrf.mxu0
          %v1556 = vadd.f32 0.0, %v1555
          %1557 = vdwg.mxu0
          %1558 = vrot.lane.b32.xlu0 %v400, 124
          %v1559 = vpop.permute.xlu0 %1558
          %1560 = vrot.lane.b32.xlu0 %v403, 124
          %v1561 = vpop.permute.xlu0 %1560
          %1562 = vrot.lane.b32.xlu0 %v400, 116
          %v1563 = vpop.permute.xlu0 %1562
          %1564 = vrot.lane.b32.xlu0 %v403, 116
          %v1565 = vpop.permute.xlu0 %1564
          %v1566 = vsel %vm429, %v1559, 0
          %v1568 = vsel %vm429, %v1561, 0
          %v1570 = vsel %vm429, %v1563, 0
          %v1572 = vsel %vm429, %v1565, 0
          %1574 = vmatpush.xpose.msra.mxu0 0.0
          %1575 = vmatpush.xpose.msra.mxu0 0.0
          %1576 = vmatpush.xpose.msra.mxu0 0.0
          %1577 = vmatpush.xpose.msra.mxu0 0.0
          %1578 = vmatpush.xpose.msra.mxu0 0.0
          %1579 = vmatpush.xpose.msra.mxu0 0.0
          %1580 = vmatpush.xpose.msra.mxu0 0.0
          %1581 = vmatpush.xpose.msra.mxu0 0.0
          %1582 = vmatpush.xpose.msra.mxu0 0.0
          %1583 = vmatpush.xpose.msra.mxu0 0.0
          %1584 = vmatpush.xpose.msra.mxu0 0.0
          %1585 = vmatpush.xpose.msra.mxu0 0.0
          %1586 = vmatpush.xpose.msra.mxu0 0.0
          %1587 = vmatpush.xpose.msra.mxu0 0.0
          %1588 = vmatpush.xpose.msra.mxu0 %v1572
          %1589 = vmatpush.xpose.msra.mxu0 %v1570
          %1590 = vmatmul.f32.gmra.mxu0 %v1566
          %v1591 = vpop.f32.mrf.mxu0
          %v1592 = vadd.f32 0.0, %v1591
          %1593 = vmatmul.f32.gmra.mxu0 %v1568
          %v1594 = vpop.f32.mrf.mxu0
          %v1595 = vadd.f32 0.0, %v1594
          %1596 = vdwg.mxu0
          %1597 = vrot.lane.b32.xlu0 %v406, 124
          %v1598 = vpop.permute.xlu0 %1597
          %1599 = vrot.lane.b32.xlu0 %v409, 124
          %v1600 = vpop.permute.xlu0 %1599
          %1601 = vrot.lane.b32.xlu0 %v406, 116
          %v1602 = vpop.permute.xlu0 %1601
          %1603 = vrot.lane.b32.xlu0 %v409, 116
          %v1604 = vpop.permute.xlu0 %1603
          %v1605 = vsel %vm429, %v1598, 0
          %v1607 = vsel %vm429, %v1600, 0
          %v1609 = vsel %vm429, %v1602, 0
          %v1611 = vsel %vm429, %v1604, 0
          %1613 = vmatpush.xpose.msra.mxu0 0.0
          %1614 = vmatpush.xpose.msra.mxu0 0.0
          %1615 = vmatpush.xpose.msra.mxu0 0.0
          %1616 = vmatpush.xpose.msra.mxu0 0.0
          %1617 = vmatpush.xpose.msra.mxu0 0.0
          %1618 = vmatpush.xpose.msra.mxu0 0.0
          %1619 = vmatpush.xpose.msra.mxu0 0.0
          %1620 = vmatpush.xpose.msra.mxu0 0.0
          %1621 = vmatpush.xpose.msra.mxu0 0.0
          %1622 = vmatpush.xpose.msra.mxu0 0.0
          %1623 = vmatpush.xpose.msra.mxu0 0.0
          %1624 = vmatpush.xpose.msra.mxu0 0.0
          %1625 = vmatpush.xpose.msra.mxu0 0.0
          %1626 = vmatpush.xpose.msra.mxu0 0.0
          %1627 = vmatpush.xpose.msra.mxu0 %v1611
          %1628 = vmatpush.xpose.msra.mxu0 %v1609
          %1629 = vmatmul.f32.gmra.mxu0 %v1605
          %v1630 = vpop.f32.mrf.mxu0
          %v1631 = vadd.f32 0.0, %v1630
          %1632 = vmatmul.f32.gmra.mxu0 %v1607
          %v1633 = vpop.f32.mrf.mxu0
          %v1634 = vadd.f32 0.0, %v1633
          %1635 = vdwg.mxu0
          %1636 = vrot.lane.b32.xlu0 %v412, 124
          %v1637 = vpop.permute.xlu0 %1636
          %1638 = vrot.lane.b32.xlu0 %v415, 124
          %v1639 = vpop.permute.xlu0 %1638
          %1640 = vrot.lane.b32.xlu0 %v412, 116
          %v1641 = vpop.permute.xlu0 %1640
          %1642 = vrot.lane.b32.xlu0 %v415, 116
          %v1643 = vpop.permute.xlu0 %1642
          %v1644 = vsel %vm429, %v1637, 0
          %v1646 = vsel %vm429, %v1639, 0
          %v1648 = vsel %vm429, %v1641, 0
          %v1650 = vsel %vm429, %v1643, 0
          %1652 = vmatpush.xpose.msra.mxu0 0.0
          %1653 = vmatpush.xpose.msra.mxu0 0.0
          %1654 = vmatpush.xpose.msra.mxu0 0.0
          %1655 = vmatpush.xpose.msra.mxu0 0.0
          %1656 = vmatpush.xpose.msra.mxu0 0.0
          %1657 = vmatpush.xpose.msra.mxu0 0.0
          %1658 = vmatpush.xpose.msra.mxu0 0.0
          %1659 = vmatpush.xpose.msra.mxu0 0.0
          %1660 = vmatpush.xpose.msra.mxu0 0.0
          %1661 = vmatpush.xpose.msra.mxu0 0.0
          %1662 = vmatpush.xpose.msra.mxu0 0.0
          %1663 = vmatpush.xpose.msra.mxu0 0.0
          %1664 = vmatpush.xpose.msra.mxu0 0.0
          %1665 = vmatpush.xpose.msra.mxu0 0.0
          %1666 = vmatpush.xpose.msra.mxu0 %v1650
          %1667 = vmatpush.xpose.msra.mxu0 %v1648
          %1668 = vmatmul.f32.gmra.mxu0 %v1644
          %v1669 = vpop.f32.mrf.mxu0
          %v1670 = vadd.f32 0.0, %v1669
          %1671 = vmatmul.f32.gmra.mxu0 %v1646
          %v1672 = vpop.f32.mrf.mxu0
          %v1673 = vadd.f32 0.0, %v1672
          %1674 = vdwg.mxu0
          %1675 = vrot.lane.b32.xlu0 %v418, 124
          %v1676 = vpop.permute.xlu0 %1675
          %1677 = vrot.lane.b32.xlu0 %v421, 124
          %v1678 = vpop.permute.xlu0 %1677
          %1679 = vrot.lane.b32.xlu0 %v418, 116
          %v1680 = vpop.permute.xlu0 %1679
          %1681 = vrot.lane.b32.xlu0 %v421, 116
          %v1682 = vpop.permute.xlu0 %1681
          %v1683 = vsel %vm429, %v1676, 0
          %v1685 = vsel %vm429, %v1678, 0
          %v1687 = vsel %vm429, %v1680, 0
          %v1689 = vsel %vm429, %v1682, 0
          %1691 = vmatpush.xpose.msra.mxu0 0.0
          %1692 = vmatpush.xpose.msra.mxu0 0.0
          %1693 = vmatpush.xpose.msra.mxu0 0.0
          %1694 = vmatpush.xpose.msra.mxu0 0.0
          %1695 = vmatpush.xpose.msra.mxu0 0.0
          %1696 = vmatpush.xpose.msra.mxu0 0.0
          %1697 = vmatpush.xpose.msra.mxu0 0.0
          %1698 = vmatpush.xpose.msra.mxu0 0.0
          %1699 = vmatpush.xpose.msra.mxu0 0.0
          %1700 = vmatpush.xpose.msra.mxu0 0.0
          %1701 = vmatpush.xpose.msra.mxu0 0.0
          %1702 = vmatpush.xpose.msra.mxu0 0.0
          %1703 = vmatpush.xpose.msra.mxu0 0.0
          %1704 = vmatpush.xpose.msra.mxu0 0.0
          %1705 = vmatpush.xpose.msra.mxu0 %v1689
          %1706 = vmatpush.xpose.msra.mxu0 %v1687
          %1707 = vmatmul.f32.gmra.mxu0 %v1683
          %v1708 = vpop.f32.mrf.mxu0
          %v1709 = vadd.f32 0.0, %v1708
          %1710 = vmatmul.f32.gmra.mxu0 %v1685
          %v1711 = vpop.f32.mrf.mxu0
          %v1712 = vadd.f32 0.0, %v1711
          %1713 = vdwg.mxu0
          %v1714 = vmul.f32 %v1436, 0.5
          %v1715 = vmul.f32 %v1439, 0.5
          %v1716 = vmul.f32 %v1475, 0.5
          %v1717 = vmul.f32 %v1478, 0.5
          %v1718 = vmul.f32 %v1514, 0.5
          %v1719 = vmul.f32 %v1517, 0.5
          %v1720 = vmul.f32 %v1553, 0.5
          %v1721 = vmul.f32 %v1556, 0.5
          %v1722 = vmul.f32 %v1592, 0.5
          %v1723 = vmul.f32 %v1595, 0.5
          %v1724 = vmul.f32 %v1631, 0.5
          %v1725 = vmul.f32 %v1634, 0.5
          %v1726 = vmul.f32 %v1670, 0.5
          %v1727 = vmul.f32 %v1673, 0.5
          %v1728 = vmul.f32 %v1709, 0.5
          %v1729 = vmul.f32 %v1712, 0.5
          %v1730 = vsel %vm736, %v1714, -inf
          %1731 = vmax.xlane.f32.xlu0 %v1730
          %v1732 = vpop.xlane.xlu0 %1731
          %v1733 = vsel %vm736, %v1715, -inf
          %1734 = vmax.xlane.f32.xlu0 %v1733
          %v1735 = vpop.xlane.xlu0 %1734
          %v1736 = vsel %vm736, %v1716, -inf
          %1737 = vmax.xlane.f32.xlu0 %v1736
          %v1738 = vpop.xlane.xlu0 %1737
          %v1739 = vsel %vm736, %v1717, -inf
          %1740 = vmax.xlane.f32.xlu0 %v1739
          %v1741 = vpop.xlane.xlu0 %1740
          %v1742 = vsel %vm736, %v1718, -inf
          %1743 = vmax.xlane.f32.xlu0 %v1742
          %v1744 = vpop.xlane.xlu0 %1743
          %v1745 = vsel %vm736, %v1719, -inf
          %1746 = vmax.xlane.f32.xlu0 %v1745
          %v1747 = vpop.xlane.xlu0 %1746
          %v1748 = vsel %vm736, %v1720, -inf
          %1749 = vmax.xlane.f32.xlu0 %v1748
          %v1750 = vpop.xlane.xlu0 %1749
          %v1751 = vsel %vm736, %v1721, -inf
          %1752 = vmax.xlane.f32.xlu0 %v1751
          %v1753 = vpop.xlane.xlu0 %1752
          %v1754 = vsel %vm736, %v1722, -inf
          %1755 = vmax.xlane.f32.xlu0 %v1754
          %v1756 = vpop.xlane.xlu0 %1755
          %v1757 = vsel %vm736, %v1723, -inf
          %1758 = vmax.xlane.f32.xlu0 %v1757
          %v1759 = vpop.xlane.xlu0 %1758
          %v1760 = vsel %vm736, %v1724, -inf
          %1761 = vmax.xlane.f32.xlu0 %v1760
          %v1762 = vpop.xlane.xlu0 %1761
          %v1763 = vsel %vm736, %v1725, -inf
          %1764 = vmax.xlane.f32.xlu0 %v1763
          %v1765 = vpop.xlane.xlu0 %1764
          %v1766 = vsel %vm736, %v1726, -inf
          %1767 = vmax.xlane.f32.xlu0 %v1766
          %v1768 = vpop.xlane.xlu0 %1767
          %v1769 = vsel %vm736, %v1727, -inf
          %1770 = vmax.xlane.f32.xlu0 %v1769
          %v1771 = vpop.xlane.xlu0 %1770
          %v1772 = vsel %vm736, %v1728, -inf
          %1773 = vmax.xlane.f32.xlu0 %v1772
          %v1774 = vpop.xlane.xlu0 %1773
          %v1775 = vsel %vm736, %v1729, -inf
          %1776 = vmax.xlane.f32.xlu0 %v1775
          %v1777 = vpop.xlane.xlu0 %1776
          %v1778 = vsub.f32 %v1714, %v1732
          %v1779 = vsub.f32 %v1715, %v1735
          %v1780 = vsub.f32 %v1716, %v1738
          %v1781 = vsub.f32 %v1717, %v1741
          %v1782 = vsub.f32 %v1718, %v1744
          %v1783 = vsub.f32 %v1719, %v1747
          %v1784 = vsub.f32 %v1720, %v1750
          %v1785 = vsub.f32 %v1721, %v1753
          %v1786 = vsub.f32 %v1722, %v1756
          %v1787 = vsub.f32 %v1723, %v1759
          %v1788 = vsub.f32 %v1724, %v1762
          %v1789 = vsub.f32 %v1725, %v1765
          %v1790 = vsub.f32 %v1726, %v1768
          %v1791 = vsub.f32 %v1727, %v1771
          %v1792 = vsub.f32 %v1728, %v1774
          %v1793 = vsub.f32 %v1729, %v1777
          %v1794 = vmul.f32 %v1778, 1.442695
          %v1795 = vpow.pop %v1794
          %v1796 = vmul.f32 %v1779, 1.442695
          %v1797 = vpow.pop %v1796
          %v1798 = vmul.f32 %v1780, 1.442695
          %v1799 = vpow.pop %v1798
          %v1800 = vmul.f32 %v1781, 1.442695
          %v1801 = vpow.pop %v1800
          %v1802 = vmul.f32 %v1782, 1.442695
          %v1803 = vpow.pop %v1802
          %v1804 = vmul.f32 %v1783, 1.442695
          %v1805 = vpow.pop %v1804
          %v1806 = vmul.f32 %v1784, 1.442695
          %v1807 = vpow.pop %v1806
          %v1808 = vmul.f32 %v1785, 1.442695
          %v1809 = vpow.pop %v1808
          %v1810 = vmul.f32 %v1786, 1.442695
          %v1811 = vpow.pop %v1810
          %v1812 = vmul.f32 %v1787, 1.442695
          %v1813 = vpow.pop %v1812
          %v1814 = vmul.f32 %v1788, 1.442695
          %v1815 = vpow.pop %v1814
          %v1816 = vmul.f32 %v1789, 1.442695
          %v1817 = vpow.pop %v1816
          %v1818 = vmul.f32 %v1790, 1.442695
          %v1819 = vpow.pop %v1818
          %v1820 = vmul.f32 %v1791, 1.442695
          %v1821 = vpow.pop %v1820
          %v1822 = vmul.f32 %v1792, 1.442695
          %v1823 = vpow.pop %v1822
          %v1824 = vmul.f32 %v1793, 1.442695
          %v1825 = vpow.pop %v1824
          %v1826 = vsel %vm736, %v1795, 0.0
          %1827 = vadd.xlane.f32.xlu0 %v1826
          %v1828 = vpop.xlane.xlu0 %1827
          %v1829 = vsel %vm736, %v1797, 0.0
          %1830 = vadd.xlane.f32.xlu0 %v1829
          %v1831 = vpop.xlane.xlu0 %1830
          %v1832 = vsel %vm736, %v1799, 0.0
          %1833 = vadd.xlane.f32.xlu0 %v1832
          %v1834 = vpop.xlane.xlu0 %1833
          %v1835 = vsel %vm736, %v1801, 0.0
          %1836 = vadd.xlane.f32.xlu0 %v1835
          %v1837 = vpop.xlane.xlu0 %1836
          %v1838 = vsel %vm736, %v1803, 0.0
          %1839 = vadd.xlane.f32.xlu0 %v1838
          %v1840 = vpop.xlane.xlu0 %1839
          %v1841 = vsel %vm736, %v1805, 0.0
          %1842 = vadd.xlane.f32.xlu0 %v1841
          %v1843 = vpop.xlane.xlu0 %1842
          %v1844 = vsel %vm736, %v1807, 0.0
          %1845 = vadd.xlane.f32.xlu0 %v1844
          %v1846 = vpop.xlane.xlu0 %1845
          %v1847 = vsel %vm736, %v1809, 0.0
          %1848 = vadd.xlane.f32.xlu0 %v1847
          %v1849 = vpop.xlane.xlu0 %1848
          %v1850 = vsel %vm736, %v1811, 0.0
          %1851 = vadd.xlane.f32.xlu0 %v1850
          %v1852 = vpop.xlane.xlu0 %1851
          %v1853 = vsel %vm736, %v1813, 0.0
          %1854 = vadd.xlane.f32.xlu0 %v1853
          %v1855 = vpop.xlane.xlu0 %1854
          %v1856 = vsel %vm736, %v1815, 0.0
          %1857 = vadd.xlane.f32.xlu0 %v1856
          %v1858 = vpop.xlane.xlu0 %1857
          %v1859 = vsel %vm736, %v1817, 0.0
          %1860 = vadd.xlane.f32.xlu0 %v1859
          %v1861 = vpop.xlane.xlu0 %1860
          %v1862 = vsel %vm736, %v1819, 0.0
          %1863 = vadd.xlane.f32.xlu0 %v1862
          %v1864 = vpop.xlane.xlu0 %1863
          %v1865 = vsel %vm736, %v1821, 0.0
          %1866 = vadd.xlane.f32.xlu0 %v1865
          %v1867 = vpop.xlane.xlu0 %1866
          %v1868 = vsel %vm736, %v1823, 0.0
          %1869 = vadd.xlane.f32.xlu0 %v1868
          %v1870 = vpop.xlane.xlu0 %1869
          %v1871 = vsel %vm736, %v1825, 0.0
          %1872 = vadd.xlane.f32.xlu0 %v1871
          %v1873 = vpop.xlane.xlu0 %1872
          %v1874 = vrcp.pop %v1828
          %v1875 = vmul.f32 %v1828, %v1874
          %v1876 = vsub.f32 1.0, %v1875
          %v1877 = vmul.f32 %v1874, %v1876
          %v1878 = vadd.f32 %v1874, %v1877
          %vm1879 = vweird.f32 %v1828
          %vm1880 = vweird.f32 %v1874
          %vm1881 = vmor %vm1879, %vm1880
          %v1882 = vsel %vm1881, %v1874, %v1878
          %v1883 = vand.u32 2147483647, %v1828
          %vm1884 = vcmp.eq.f32.partialorder %v1883, 8.507059e+37
          %v1885 = vand.u32 %v1828, 2147483648
          %v1886 = vor.u32 1.1754944e-38, %v1885
          %v1887 = vsel %vm1884, %v1886, %v1882
          %v1888 = vmul.f32 %v1795, %v1887
          %v1889 = vrcp.pop %v1831
          %v1890 = vmul.f32 %v1831, %v1889
          %v1891 = vsub.f32 1.0, %v1890
          %v1892 = vmul.f32 %v1889, %v1891
          %v1893 = vadd.f32 %v1889, %v1892
          %vm1894 = vweird.f32 %v1831
          %vm1895 = vweird.f32 %v1889
          %vm1896 = vmor %vm1894, %vm1895
          %v1897 = vsel %vm1896, %v1889, %v1893
          %v1898 = vand.u32 2147483647, %v1831
          %vm1899 = vcmp.eq.f32.partialorder %v1898, 8.507059e+37
          %v1900 = vand.u32 %v1831, 2147483648
          %v1901 = vor.u32 1.1754944e-38, %v1900
          %v1902 = vsel %vm1899, %v1901, %v1897
          %v1903 = vmul.f32 %v1797, %v1902
          %v1904 = vrcp.pop %v1834
          %v1905 = vmul.f32 %v1834, %v1904
          %v1906 = vsub.f32 1.0, %v1905
          %v1907 = vmul.f32 %v1904, %v1906
          %v1908 = vadd.f32 %v1904, %v1907
          %vm1909 = vweird.f32 %v1834
          %vm1910 = vweird.f32 %v1904
          %vm1911 = vmor %vm1909, %vm1910
          %v1912 = vsel %vm1911, %v1904, %v1908
          %v1913 = vand.u32 2147483647, %v1834
          %vm1914 = vcmp.eq.f32.partialorder %v1913, 8.507059e+37
          %v1915 = vand.u32 %v1834, 2147483648
          %v1916 = vor.u32 1.1754944e-38, %v1915
          %v1917 = vsel %vm1914, %v1916, %v1912
          %v1918 = vmul.f32 %v1799, %v1917
          %v1919 = vrcp.pop %v1837
          %v1920 = vmul.f32 %v1837, %v1919
          %v1921 = vsub.f32 1.0, %v1920
          %v1922 = vmul.f32 %v1919, %v1921
          %v1923 = vadd.f32 %v1919, %v1922
          %vm1924 = vweird.f32 %v1837
          %vm1925 = vweird.f32 %v1919
          %vm1926 = vmor %vm1924, %vm1925
          %v1927 = vsel %vm1926, %v1919, %v1923
          %v1928 = vand.u32 2147483647, %v1837
          %vm1929 = vcmp.eq.f32.partialorder %v1928, 8.507059e+37
          %v1930 = vand.u32 %v1837, 2147483648
          %v1931 = vor.u32 1.1754944e-38, %v1930
          %v1932 = vsel %vm1929, %v1931, %v1927
          %v1933 = vmul.f32 %v1801, %v1932
          %v1934 = vrcp.pop %v1840
          %v1935 = vmul.f32 %v1840, %v1934
          %v1936 = vsub.f32 1.0, %v1935
          %v1937 = vmul.f32 %v1934, %v1936
          %v1938 = vadd.f32 %v1934, %v1937
          %vm1939 = vweird.f32 %v1840
          %vm1940 = vweird.f32 %v1934
          %vm1941 = vmor %vm1939, %vm1940
          %v1942 = vsel %vm1941, %v1934, %v1938
          %v1943 = vand.u32 2147483647, %v1840
          %vm1944 = vcmp.eq.f32.partialorder %v1943, 8.507059e+37
          %v1945 = vand.u32 %v1840, 2147483648
          %v1946 = vor.u32 1.1754944e-38, %v1945
          %v1947 = vsel %vm1944, %v1946, %v1942
          %v1948 = vmul.f32 %v1803, %v1947
          %v1949 = vrcp.pop %v1843
          %v1950 = vmul.f32 %v1843, %v1949
          %v1951 = vsub.f32 1.0, %v1950
          %v1952 = vmul.f32 %v1949, %v1951
          %v1953 = vadd.f32 %v1949, %v1952
          %vm1954 = vweird.f32 %v1843
          %vm1955 = vweird.f32 %v1949
          %vm1956 = vmor %vm1954, %vm1955
          %v1957 = vsel %vm1956, %v1949, %v1953
          %v1958 = vand.u32 2147483647, %v1843
          %vm1959 = vcmp.eq.f32.partialorder %v1958, 8.507059e+37
          %v1960 = vand.u32 %v1843, 2147483648
          %v1961 = vor.u32 1.1754944e-38, %v1960
          %v1962 = vsel %vm1959, %v1961, %v1957
          %v1963 = vmul.f32 %v1805, %v1962
          %v1964 = vrcp.pop %v1846
          %v1965 = vmul.f32 %v1846, %v1964
          %v1966 = vsub.f32 1.0, %v1965
          %v1967 = vmul.f32 %v1964, %v1966
          %v1968 = vadd.f32 %v1964, %v1967
          %vm1969 = vweird.f32 %v1846
          %vm1970 = vweird.f32 %v1964
          %vm1971 = vmor %vm1969, %vm1970
          %v1972 = vsel %vm1971, %v1964, %v1968
          %v1973 = vand.u32 2147483647, %v1846
          %vm1974 = vcmp.eq.f32.partialorder %v1973, 8.507059e+37
          %v1975 = vand.u32 %v1846, 2147483648
          %v1976 = vor.u32 1.1754944e-38, %v1975
          %v1977 = vsel %vm1974, %v1976, %v1972
          %v1978 = vmul.f32 %v1807, %v1977
          %v1979 = vrcp.pop %v1849
          %v1980 = vmul.f32 %v1849, %v1979
          %v1981 = vsub.f32 1.0, %v1980
          %v1982 = vmul.f32 %v1979, %v1981
          %v1983 = vadd.f32 %v1979, %v1982
          %vm1984 = vweird.f32 %v1849
          %vm1985 = vweird.f32 %v1979
          %vm1986 = vmor %vm1984, %vm1985
          %v1987 = vsel %vm1986, %v1979, %v1983
          %v1988 = vand.u32 2147483647, %v1849
          %vm1989 = vcmp.eq.f32.partialorder %v1988, 8.507059e+37
          %v1990 = vand.u32 %v1849, 2147483648
          %v1991 = vor.u32 1.1754944e-38, %v1990
          %v1992 = vsel %vm1989, %v1991, %v1987
          %v1993 = vmul.f32 %v1809, %v1992
          %v1994 = vrcp.pop %v1852
          %v1995 = vmul.f32 %v1852, %v1994
          %v1996 = vsub.f32 1.0, %v1995
          %v1997 = vmul.f32 %v1994, %v1996
          %v1998 = vadd.f32 %v1994, %v1997
          %vm1999 = vweird.f32 %v1852
          %vm2000 = vweird.f32 %v1994
          %vm2001 = vmor %vm1999, %vm2000
          %v2002 = vsel %vm2001, %v1994, %v1998
          %v2003 = vand.u32 2147483647, %v1852
          %vm2004 = vcmp.eq.f32.partialorder %v2003, 8.507059e+37
          %v2005 = vand.u32 %v1852, 2147483648
          %v2006 = vor.u32 1.1754944e-38, %v2005
          %v2007 = vsel %vm2004, %v2006, %v2002
          %v2008 = vmul.f32 %v1811, %v2007
          %v2009 = vrcp.pop %v1855
          %v2010 = vmul.f32 %v1855, %v2009
          %v2011 = vsub.f32 1.0, %v2010
          %v2012 = vmul.f32 %v2009, %v2011
          %v2013 = vadd.f32 %v2009, %v2012
          %vm2014 = vweird.f32 %v1855
          %vm2015 = vweird.f32 %v2009
          %vm2016 = vmor %vm2014, %vm2015
          %v2017 = vsel %vm2016, %v2009, %v2013
          %v2018 = vand.u32 2147483647, %v1855
          %vm2019 = vcmp.eq.f32.partialorder %v2018, 8.507059e+37
          %v2020 = vand.u32 %v1855, 2147483648
          %v2021 = vor.u32 1.1754944e-38, %v2020
          %v2022 = vsel %vm2019, %v2021, %v2017
          %v2023 = vmul.f32 %v1813, %v2022
          %v2024 = vrcp.pop %v1858
          %v2025 = vmul.f32 %v1858, %v2024
          %v2026 = vsub.f32 1.0, %v2025
          %v2027 = vmul.f32 %v2024, %v2026
          %v2028 = vadd.f32 %v2024, %v2027
          %vm2029 = vweird.f32 %v1858
          %vm2030 = vweird.f32 %v2024
          %vm2031 = vmor %vm2029, %vm2030
          %v2032 = vsel %vm2031, %v2024, %v2028
          %v2033 = vand.u32 2147483647, %v1858
          %vm2034 = vcmp.eq.f32.partialorder %v2033, 8.507059e+37
          %v2035 = vand.u32 %v1858, 2147483648
          %v2036 = vor.u32 1.1754944e-38, %v2035
          %v2037 = vsel %vm2034, %v2036, %v2032
          %v2038 = vmul.f32 %v1815, %v2037
          %v2039 = vrcp.pop %v1861
          %v2040 = vmul.f32 %v1861, %v2039
          %v2041 = vsub.f32 1.0, %v2040
          %v2042 = vmul.f32 %v2039, %v2041
          %v2043 = vadd.f32 %v2039, %v2042
          %vm2044 = vweird.f32 %v1861
          %vm2045 = vweird.f32 %v2039
          %vm2046 = vmor %vm2044, %vm2045
          %v2047 = vsel %vm2046, %v2039, %v2043
          %v2048 = vand.u32 2147483647, %v1861
          %vm2049 = vcmp.eq.f32.partialorder %v2048, 8.507059e+37
          %v2050 = vand.u32 %v1861, 2147483648
          %v2051 = vor.u32 1.1754944e-38, %v2050
          %v2052 = vsel %vm2049, %v2051, %v2047
          %v2053 = vmul.f32 %v1817, %v2052
          %v2054 = vrcp.pop %v1864
          %v2055 = vmul.f32 %v1864, %v2054
          %v2056 = vsub.f32 1.0, %v2055
          %v2057 = vmul.f32 %v2054, %v2056
          %v2058 = vadd.f32 %v2054, %v2057
          %vm2059 = vweird.f32 %v1864
          %vm2060 = vweird.f32 %v2054
          %vm2061 = vmor %vm2059, %vm2060
          %v2062 = vsel %vm2061, %v2054, %v2058
          %v2063 = vand.u32 2147483647, %v1864
          %vm2064 = vcmp.eq.f32.partialorder %v2063, 8.507059e+37
          %v2065 = vand.u32 %v1864, 2147483648
          %v2066 = vor.u32 1.1754944e-38, %v2065
          %v2067 = vsel %vm2064, %v2066, %v2062
          %v2068 = vmul.f32 %v1819, %v2067
          %v2069 = vrcp.pop %v1867
          %v2070 = vmul.f32 %v1867, %v2069
          %v2071 = vsub.f32 1.0, %v2070
          %v2072 = vmul.f32 %v2069, %v2071
          %v2073 = vadd.f32 %v2069, %v2072
          %vm2074 = vweird.f32 %v1867
          %vm2075 = vweird.f32 %v2069
          %vm2076 = vmor %vm2074, %vm2075
          %v2077 = vsel %vm2076, %v2069, %v2073
          %v2078 = vand.u32 2147483647, %v1867
          %vm2079 = vcmp.eq.f32.partialorder %v2078, 8.507059e+37
          %v2080 = vand.u32 %v1867, 2147483648
          %v2081 = vor.u32 1.1754944e-38, %v2080
          %v2082 = vsel %vm2079, %v2081, %v2077
          %v2083 = vmul.f32 %v1821, %v2082
          %v2084 = vrcp.pop %v1870
          %v2085 = vmul.f32 %v1870, %v2084
          %v2086 = vsub.f32 1.0, %v2085
          %v2087 = vmul.f32 %v2084, %v2086
          %v2088 = vadd.f32 %v2084, %v2087
          %vm2089 = vweird.f32 %v1870
          %vm2090 = vweird.f32 %v2084
          %vm2091 = vmor %vm2089, %vm2090
          %v2092 = vsel %vm2091, %v2084, %v2088
          %v2093 = vand.u32 2147483647, %v1870
          %vm2094 = vcmp.eq.f32.partialorder %v2093, 8.507059e+37
          %v2095 = vand.u32 %v1870, 2147483648
          %v2096 = vor.u32 1.1754944e-38, %v2095
          %v2097 = vsel %vm2094, %v2096, %v2092
          %v2098 = vmul.f32 %v1823, %v2097
          %v2099 = vrcp.pop %v1873
          %v2100 = vmul.f32 %v1873, %v2099
          %v2101 = vsub.f32 1.0, %v2100
          %v2102 = vmul.f32 %v2099, %v2101
          %v2103 = vadd.f32 %v2099, %v2102
          %vm2104 = vweird.f32 %v1873
          %vm2105 = vweird.f32 %v2099
          %vm2106 = vmor %vm2104, %vm2105
          %v2107 = vsel %vm2106, %v2099, %v2103
          %v2108 = vand.u32 2147483647, %v1873
          %vm2109 = vcmp.eq.f32.partialorder %v2108, 8.507059e+37
          %v2110 = vand.u32 %v1873, 2147483648
          %v2111 = vor.u32 1.1754944e-38, %v2110
          %v2112 = vsel %vm2109, %v2111, %v2107
          %v2113 = vmul.f32 %v1825, %v2112
          %2114 = vrot.lane.b32.xlu0 %v376, 108
          %v2115 = vpop.permute.xlu0 %2114
          %2116 = vrot.lane.b32.xlu0 %v379, 108
          %v2117 = vpop.permute.xlu0 %2116
          %v2121 = vsel %vm736, %v1888, 0
          %v2124 = vsel %vm736, %v1903, 0
          %2126 = vmatpush.msra.mxu0 0.0
          %2127 = vmatpush.msra.mxu0 0.0
          %2128 = vmatpush.msra.mxu0 0.0
          %2129 = vmatpush.msra.mxu0 0.0
          %2130 = vmatpush.msra.mxu0 0.0
          %2131 = vmatpush.msra.mxu0 0.0
          %2132 = vmatpush.msra.mxu0 0.0
          %2133 = vmatpush.msra.mxu0 0.0
          %2134 = vmatpush.msra.mxu0 0.0
          %2135 = vmatpush.msra.mxu0 0.0
          %2136 = vmatpush.msra.mxu0 0.0
          %2137 = vmatpush.msra.mxu0 0.0
          %2138 = vmatpush.msra.mxu0 0.0
          %2139 = vmatpush.msra.mxu0 0.0
          %2140 = vmatpush.msra.mxu0 %v2117
          %2141 = vmatpush.msra.mxu0 %v2115
          %2142 = vmatmul.f32.gmra.mxu0 %v2121
          %v2143 = vpop.f32.mrf.mxu0
          %v2144 = vadd.f32 0.0, %v2143
          %2145 = vmatmul.f32.gmra.mxu0 %v2124
          %v2146 = vpop.f32.mrf.mxu0
          %v2147 = vadd.f32 0.0, %v2146
          %2148 = vdwg.mxu0
          %2149 = vrot.lane.b32.xlu0 %v382, 108
          %v2150 = vpop.permute.xlu0 %2149
          %2151 = vrot.lane.b32.xlu0 %v385, 108
          %v2152 = vpop.permute.xlu0 %2151
          %v2156 = vsel %vm736, %v1918, 0
          %v2159 = vsel %vm736, %v1933, 0
          %2161 = vmatpush.msra.mxu0 0.0
          %2162 = vmatpush.msra.mxu0 0.0
          %2163 = vmatpush.msra.mxu0 0.0
          %2164 = vmatpush.msra.mxu0 0.0
          %2165 = vmatpush.msra.mxu0 0.0
          %2166 = vmatpush.msra.mxu0 0.0
          %2167 = vmatpush.msra.mxu0 0.0
          %2168 = vmatpush.msra.mxu0 0.0
          %2169 = vmatpush.msra.mxu0 0.0
          %2170 = vmatpush.msra.mxu0 0.0
          %2171 = vmatpush.msra.mxu0 0.0
          %2172 = vmatpush.msra.mxu0 0.0
          %2173 = vmatpush.msra.mxu0 0.0
          %2174 = vmatpush.msra.mxu0 0.0
          %2175 = vmatpush.msra.mxu0 %v2152
          %2176 = vmatpush.msra.mxu0 %v2150
          %2177 = vmatmul.f32.gmra.mxu0 %v2156
          %v2178 = vpop.f32.mrf.mxu0
          %v2179 = vadd.f32 0.0, %v2178
          %2180 = vmatmul.f32.gmra.mxu0 %v2159
          %v2181 = vpop.f32.mrf.mxu0
          %v2182 = vadd.f32 0.0, %v2181
          %2183 = vdwg.mxu0
          %2184 = vrot.lane.b32.xlu0 %v388, 108
          %v2185 = vpop.permute.xlu0 %2184
          %2186 = vrot.lane.b32.xlu0 %v391, 108
          %v2187 = vpop.permute.xlu0 %2186
          %v2191 = vsel %vm736, %v1948, 0
          %v2194 = vsel %vm736, %v1963, 0
          %2196 = vmatpush.msra.mxu0 0.0
          %2197 = vmatpush.msra.mxu0 0.0
          %2198 = vmatpush.msra.mxu0 0.0
          %2199 = vmatpush.msra.mxu0 0.0
          %2200 = vmatpush.msra.mxu0 0.0
          %2201 = vmatpush.msra.mxu0 0.0
          %2202 = vmatpush.msra.mxu0 0.0
          %2203 = vmatpush.msra.mxu0 0.0
          %2204 = vmatpush.msra.mxu0 0.0
          %2205 = vmatpush.msra.mxu0 0.0
          %2206 = vmatpush.msra.mxu0 0.0
          %2207 = vmatpush.msra.mxu0 0.0
          %2208 = vmatpush.msra.mxu0 0.0
          %2209 = vmatpush.msra.mxu0 0.0
          %2210 = vmatpush.msra.mxu0 %v2187
          %2211 = vmatpush.msra.mxu0 %v2185
          %2212 = vmatmul.f32.gmra.mxu0 %v2191
          %v2213 = vpop.f32.mrf.mxu0
          %v2214 = vadd.f32 0.0, %v2213
          %2215 = vmatmul.f32.gmra.mxu0 %v2194
          %v2216 = vpop.f32.mrf.mxu0
          %v2217 = vadd.f32 0.0, %v2216
          %2218 = vdwg.mxu0
          %2219 = vrot.lane.b32.xlu0 %v394, 108
          %v2220 = vpop.permute.xlu0 %2219
          %2221 = vrot.lane.b32.xlu0 %v397, 108
          %v2222 = vpop.permute.xlu0 %2221
          %v2226 = vsel %vm736, %v1978, 0
          %v2229 = vsel %vm736, %v1993, 0
          %2231 = vmatpush.msra.mxu0 0.0
          %2232 = vmatpush.msra.mxu0 0.0
          %2233 = vmatpush.msra.mxu0 0.0
          %2234 = vmatpush.msra.mxu0 0.0
          %2235 = vmatpush.msra.mxu0 0.0
          %2236 = vmatpush.msra.mxu0 0.0
          %2237 = vmatpush.msra.mxu0 0.0
          %2238 = vmatpush.msra.mxu0 0.0
          %2239 = vmatpush.msra.mxu0 0.0
          %2240 = vmatpush.msra.mxu0 0.0
          %2241 = vmatpush.msra.mxu0 0.0
          %2242 = vmatpush.msra.mxu0 0.0
          %2243 = vmatpush.msra.mxu0 0.0
          %2244 = vmatpush.msra.mxu0 0.0
          %2245 = vmatpush.msra.mxu0 %v2222
          %2246 = vmatpush.msra.mxu0 %v2220
          %2247 = vmatmul.f32.gmra.mxu0 %v2226
          %v2248 = vpop.f32.mrf.mxu0
          %v2249 = vadd.f32 0.0, %v2248
          %2250 = vmatmul.f32.gmra.mxu0 %v2229
          %v2251 = vpop.f32.mrf.mxu0
          %v2252 = vadd.f32 0.0, %v2251
          %2253 = vdwg.mxu0
          %2254 = vrot.lane.b32.xlu0 %v400, 108
          %v2255 = vpop.permute.xlu0 %2254
          %2256 = vrot.lane.b32.xlu0 %v403, 108
          %v2257 = vpop.permute.xlu0 %2256
          %v2261 = vsel %vm736, %v2008, 0
          %v2264 = vsel %vm736, %v2023, 0
          %2266 = vmatpush.msra.mxu0 0.0
          %2267 = vmatpush.msra.mxu0 0.0
          %2268 = vmatpush.msra.mxu0 0.0
          %2269 = vmatpush.msra.mxu0 0.0
          %2270 = vmatpush.msra.mxu0 0.0
          %2271 = vmatpush.msra.mxu0 0.0
          %2272 = vmatpush.msra.mxu0 0.0
          %2273 = vmatpush.msra.mxu0 0.0
          %2274 = vmatpush.msra.mxu0 0.0
          %2275 = vmatpush.msra.mxu0 0.0
          %2276 = vmatpush.msra.mxu0 0.0
          %2277 = vmatpush.msra.mxu0 0.0
          %2278 = vmatpush.msra.mxu0 0.0
          %2279 = vmatpush.msra.mxu0 0.0
          %2280 = vmatpush.msra.mxu0 %v2257
          %2281 = vmatpush.msra.mxu0 %v2255
          %2282 = vmatmul.f32.gmra.mxu0 %v2261
          %v2283 = vpop.f32.mrf.mxu0
          %v2284 = vadd.f32 0.0, %v2283
          %2285 = vmatmul.f32.gmra.mxu0 %v2264
          %v2286 = vpop.f32.mrf.mxu0
          %v2287 = vadd.f32 0.0, %v2286
          %2288 = vdwg.mxu0
          %2289 = vrot.lane.b32.xlu0 %v406, 108
          %v2290 = vpop.permute.xlu0 %2289
          %2291 = vrot.lane.b32.xlu0 %v409, 108
          %v2292 = vpop.permute.xlu0 %2291
          %v2296 = vsel %vm736, %v2038, 0
          %v2299 = vsel %vm736, %v2053, 0
          %2301 = vmatpush.msra.mxu0 0.0
          %2302 = vmatpush.msra.mxu0 0.0
          %2303 = vmatpush.msra.mxu0 0.0
          %2304 = vmatpush.msra.mxu0 0.0
          %2305 = vmatpush.msra.mxu0 0.0
          %2306 = vmatpush.msra.mxu0 0.0
          %2307 = vmatpush.msra.mxu0 0.0
          %2308 = vmatpush.msra.mxu0 0.0
          %2309 = vmatpush.msra.mxu0 0.0
          %2310 = vmatpush.msra.mxu0 0.0
          %2311 = vmatpush.msra.mxu0 0.0
          %2312 = vmatpush.msra.mxu0 0.0
          %2313 = vmatpush.msra.mxu0 0.0
          %2314 = vmatpush.msra.mxu0 0.0
          %2315 = vmatpush.msra.mxu0 %v2292
          %2316 = vmatpush.msra.mxu0 %v2290
          %2317 = vmatmul.f32.gmra.mxu0 %v2296
          %v2318 = vpop.f32.mrf.mxu0
          %v2319 = vadd.f32 0.0, %v2318
          %2320 = vmatmul.f32.gmra.mxu0 %v2299
          %v2321 = vpop.f32.mrf.mxu0
          %v2322 = vadd.f32 0.0, %v2321
          %2323 = vdwg.mxu0
          %2324 = vrot.lane.b32.xlu0 %v412, 108
          %v2325 = vpop.permute.xlu0 %2324
          %2326 = vrot.lane.b32.xlu0 %v415, 108
          %v2327 = vpop.permute.xlu0 %2326
          %v2331 = vsel %vm736, %v2068, 0
          %v2334 = vsel %vm736, %v2083, 0
          %2336 = vmatpush.msra.mxu0 0.0
          %2337 = vmatpush.msra.mxu0 0.0
          %2338 = vmatpush.msra.mxu0 0.0
          %2339 = vmatpush.msra.mxu0 0.0
          %2340 = vmatpush.msra.mxu0 0.0
          %2341 = vmatpush.msra.mxu0 0.0
          %2342 = vmatpush.msra.mxu0 0.0
          %2343 = vmatpush.msra.mxu0 0.0
          %2344 = vmatpush.msra.mxu0 0.0
          %2345 = vmatpush.msra.mxu0 0.0
          %2346 = vmatpush.msra.mxu0 0.0
          %2347 = vmatpush.msra.mxu0 0.0
          %2348 = vmatpush.msra.mxu0 0.0
          %2349 = vmatpush.msra.mxu0 0.0
          %2350 = vmatpush.msra.mxu0 %v2327
          %2351 = vmatpush.msra.mxu0 %v2325
          %2352 = vmatmul.f32.gmra.mxu0 %v2331
          %v2353 = vpop.f32.mrf.mxu0
          %v2354 = vadd.f32 0.0, %v2353
          %2355 = vmatmul.f32.gmra.mxu0 %v2334
          %v2356 = vpop.f32.mrf.mxu0
          %v2357 = vadd.f32 0.0, %v2356
          %2358 = vdwg.mxu0
          %2359 = vrot.lane.b32.xlu0 %v418, 108
          %v2360 = vpop.permute.xlu0 %2359
          %2361 = vrot.lane.b32.xlu0 %v421, 108
          %v2362 = vpop.permute.xlu0 %2361
          %v2366 = vsel %vm736, %v2098, 0
          %v2369 = vsel %vm736, %v2113, 0
          %2371 = vmatpush.msra.mxu0 0.0
          %2372 = vmatpush.msra.mxu0 0.0
          %2373 = vmatpush.msra.mxu0 0.0
          %2374 = vmatpush.msra.mxu0 0.0
          %2375 = vmatpush.msra.mxu0 0.0
          %2376 = vmatpush.msra.mxu0 0.0
          %2377 = vmatpush.msra.mxu0 0.0
          %2378 = vmatpush.msra.mxu0 0.0
          %2379 = vmatpush.msra.mxu0 0.0
          %2380 = vmatpush.msra.mxu0 0.0
          %2381 = vmatpush.msra.mxu0 0.0
          %2382 = vmatpush.msra.mxu0 0.0
          %2383 = vmatpush.msra.mxu0 0.0
          %2384 = vmatpush.msra.mxu0 0.0
          %2385 = vmatpush.msra.mxu0 %v2362
          %2386 = vmatpush.msra.mxu0 %v2360
          %2387 = vmatmul.f32.gmra.mxu0 %v2366
          %v2388 = vpop.f32.mrf.mxu0
          %v2389 = vadd.f32 0.0, %v2388
          %2390 = vmatmul.f32.gmra.mxu0 %v2369
          %v2391 = vpop.f32.mrf.mxu0
          %v2392 = vadd.f32 0.0, %v2391
          %2393 = vdwg.mxu0
          %v2394 = vld [vmem:[%s3] sm:$0xff]
          %2396 = vrot.lane.b32.xlu0 %v2394, 124
          %v2397 = vpop.permute.xlu0 %2396
          %v2398 = vsel %vm429, %v2397, 0
          %v2401 = vsel %vm429, %v2144, 0
          %v2404 = vsel %vm429, %v2147, 0
          %v2407 = vsel %vm429, %v2179, 0
          %v2410 = vsel %vm429, %v2182, 0
          %v2413 = vsel %vm429, %v2214, 0
          %v2416 = vsel %vm429, %v2217, 0
          %v2419 = vsel %vm429, %v2249, 0
          %v2422 = vsel %vm429, %v2252, 0
          %v2425 = vsel %vm429, %v2284, 0
          %v2428 = vsel %vm429, %v2287, 0
          %v2431 = vsel %vm429, %v2319, 0
          %v2434 = vsel %vm429, %v2322, 0
          %v2437 = vsel %vm429, %v2354, 0
          %v2440 = vsel %vm429, %v2357, 0
          %v2443 = vsel %vm429, %v2389, 0
          %v2446 = vsel %vm429, %v2392, 0
          %2448 = vmatpush.xpose.msra.mxu0 %v2446
          %2449 = vmatpush.xpose.msra.mxu0 %v2443
          %2450 = vmatpush.xpose.msra.mxu0 %v2440
          %2451 = vmatpush.xpose.msra.mxu0 %v2437
          %2452 = vmatpush.xpose.msra.mxu0 %v2434
          %2453 = vmatpush.xpose.msra.mxu0 %v2431
          %2454 = vmatpush.xpose.msra.mxu0 %v2428
          %2455 = vmatpush.xpose.msra.mxu0 %v2425
          %2456 = vmatpush.xpose.msra.mxu0 %v2422
          %2457 = vmatpush.xpose.msra.mxu0 %v2419
          %2458 = vmatpush.xpose.msra.mxu0 %v2416
          %2459 = vmatpush.xpose.msra.mxu0 %v2413
          %2460 = vmatpush.xpose.msra.mxu0 %v2410
          %2461 = vmatpush.xpose.msra.mxu0 %v2407
          %2462 = vmatpush.xpose.msra.mxu0 %v2404
          %2463 = vmatpush.xpose.msra.mxu0 %v2401
          %2464 = vmatmul.f32.gmra.mxu0 %v2398
          %v2465 = vpop.f32.mrf.mxu0
          %v2466 = vadd.f32 0.0, %v2465
          %2467 = vdwg.mxu0
          %v2469 = vsel %vm429, %v1401, 0
          %v2472 = vsel %vm429, %v1151, 0
          %v2475 = vsel %vm429, %v1154, 0
          %v2478 = vsel %vm429, %v1186, 0
          %v2481 = vsel %vm429, %v1189, 0
          %v2484 = vsel %vm429, %v1221, 0
          %v2487 = vsel %vm429, %v1224, 0
          %v2490 = vsel %vm429, %v1256, 0
          %v2493 = vsel %vm429, %v1259, 0
          %v2496 = vsel %vm429, %v1291, 0
          %v2499 = vsel %vm429, %v1294, 0
          %v2502 = vsel %vm429, %v1326, 0
          %v2505 = vsel %vm429, %v1329, 0
          %v2508 = vsel %vm429, %v1361, 0
          %v2511 = vsel %vm429, %v1364, 0
          %v2514 = vsel %vm429, %v1396, 0
          %v2517 = vsel %vm429, %v1399, 0
          %2519 = vmatpush.xpose.msra.mxu0 %v2517
          %2520 = vmatpush.xpose.msra.mxu0 %v2514
          %2521 = vmatpush.xpose.msra.mxu0 %v2511
          %2522 = vmatpush.xpose.msra.mxu0 %v2508
          %2523 = vmatpush.xpose.msra.mxu0 %v2505
          %2524 = vmatpush.xpose.msra.mxu0 %v2502
          %2525 = vmatpush.xpose.msra.mxu0 %v2499
          %2526 = vmatpush.xpose.msra.mxu0 %v2496
          %2527 = vmatpush.xpose.msra.mxu0 %v2493
          %2528 = vmatpush.xpose.msra.mxu0 %v2490
          %2529 = vmatpush.xpose.msra.mxu0 %v2487
          %2530 = vmatpush.xpose.msra.mxu0 %v2484
          %2531 = vmatpush.xpose.msra.mxu0 %v2481
          %2532 = vmatpush.xpose.msra.mxu0 %v2478
          %2533 = vmatpush.xpose.msra.mxu0 %v2475
          %2534 = vmatpush.xpose.msra.mxu0 %v2472
          %2535 = vmatmul.f32.gmra.mxu0 %v2469
          %v2536 = vpop.f32.mrf.mxu0
          %v2537 = vadd.f32 %v2466, %v2536
          %2538 = vdwg.mxu0
          %v2539 = vld [vmem:[%s4] sm:$0xff]
          %2541 = vset.pattern.permute.xlu0 0
          %2542 = vperm.xlu0 %2541, %v2539
          %v2543 = vpop.permute.xlu0 %2542
          %v2545 = vadd.f32 %v2537, %v2543
          %s2546 = smul.u32 %s24, 8
          %s2547 = scalar_lea.vmem [#allocation2], %s2546
          %2548 = vst [vmem:[%s2547] sm:$0xff] %v2545
        $region52: #{tpu_custom_call.1} parent=47 // pred_fallthru
          _
        %p2549 = scmp.eq.s32.totalorder %s23, 1
        %p2550 = scmp.eq.s32.totalorder %s24, 0
        %p2551 = pnand %p2549, %p2550
        %p2552 = pneg %p2551
        // Predicated region
        $region53: #{tpu_custom_call.1} parent=47 // pred_check
          _
        $region54: #{tpu_custom_call.1} parent=47 // pred_check_branch
          %2554 = sbr.rel (%p2551) target = $region56
        $region55: #{tpu_custom_call.1} parent=47 // pred_region
          %v2555 = vld [vmem:[#allocation2] sm:$0xff]
          %v2556 = vadd.f32 %v2555, 0.0
          %2557 = vadd.xlane.f32.xlu0 %v2556
          %v2558 = vpop.xlane.xlu0 %2557
          %v2559 = vmul.f32 %v2558, 0.0078125
          %v2560 = vsub.f32 %v2555, %v2559
          %v2561 = vmul.f32 %v2560, %v2560
          %v2562 = vadd.f32 %v2561, 0.0
          %2563 = vadd.xlane.f32.xlu0 %v2562
          %v2564 = vpop.xlane.xlu0 %2563
          %v2565 = vmul.f32 %v2564, 0.0078125
          %v2566 = vadd.f32 %v2565, 1e-05
          %v2567 = vrsqrt.pop %v2566
          %v2568 = vmul.f32 %v2567, %v2566
          %v2569 = vmul.f32 %v2568, %v2567
          %v2570 = vmul.f32 0.5, %v2569
          %v2571 = vsub.f32 1.5, %v2570
          %v2572 = vmul.f32 %v2567, %v2571
          %vm2573 = vweird.f32 %v2566
          %vm2574 = vweird.f32 %v2567
          %vm2575 = vmor %vm2573, %vm2574
          %v2576 = vsel %vm2575, %v2567, %v2572
          %v2577 = vld [vmem:[%s5] sm:$0xff]
          %v2578 = vmul.f32 %v2577, %v2576
          %vm2579 = vcmask 7168
          %2580 = vst.msk [vmem:[#allocation3] sm:$0xff] %vm2579, %v2578
          %v2581 = vld [vmem:[%s6] sm:$0xff]
          %v2582 = vmul.f32 %v2559, %v2578
          %v2583 = vsub.f32 %v2581, %v2582
          %2584 = vst.msk [vmem:[#allocation4] sm:$0xff] %vm2579, %v2583
        $region56: #{tpu_custom_call.1} parent=47 // pred_fallthru
          _
        // Predicated region
        $region57: #{tpu_custom_call.1} parent=47 // pred_check
          %p2585 = pneg %p2549
        $region58: #{tpu_custom_call.1} parent=47 // pred_check_branch
          %2587 = sbr.rel (%p2585) target = $region60
        $region59: #{tpu_custom_call.1} parent=47 // pred_region
          %s2588 = smul.u32 %s24, 8
          %s2589 = scalar_lea.vmem [#allocation2], %s2588
          %v2590 = vld [vmem:[%s2589] sm:$0xff]
          %v2591 = vld [vmem:[#allocation3] sm:$0xff]
          %2593 = vset.pattern.permute.xlu0 0
          %2594 = vperm.xlu0 %2593, %v2591
          %v2595 = vpop.permute.xlu0 %2594
          %v2597 = vmul.f32 %v2590, %v2595
          %v2598 = vld [vmem:[#allocation4] sm:$0xff]
          %2600 = vset.pattern.permute.xlu0 0
          %2601 = vperm.xlu0 %2600, %v2598
          %v2602 = vpop.permute.xlu0 %2601
          %v2604 = vadd.f32 %v2597, %v2602
          %v2605 = vmax.f32 %v2604, 0.0
          %2606 = vst [vmem:[#allocation5] sm:$0xff] %v2605
        $region60: #{tpu_custom_call.1} parent=47 // pred_fallthru
          _
        // Predicated region
        $region61: #{tpu_custom_call.1} parent=47 // pred_check
          %p2607 = pneg %p201
        $region62: #{tpu_custom_call.1} parent=47 // pred_check_branch
          %2609 = sbr.rel (%p2607) target = $region64
        $region63: #{tpu_custom_call.1} parent=47 // pred_region
          %2611 = vsyncadd [#allocation6], 0
          %s2612 = smul.addr %s24, 8
          %s2613 = scalar_lea.hbm %s7, %s2612
          %s2615 = sshll.u32 [#allocation5], 4
          %s2616 = int_to_ptr.vmem [resolvable:$true] %s2615
          %s2617 = sshll.u32 %s2613, 4
          %s2618 = int_to_ptr.hbm [resolvable:$true] %s2617
          %2620 = dma.vmem_to_hbm [thread:$0]  %s2616, 128, %s2618, [#allocation6]
        $region64: #{tpu_custom_call.1} parent=47 // pred_fallthru
          _
        // Predicated region
        $region65: #{tpu_custom_call.1} parent=47 // pred_check
          %p2621 = pneg %p201
        $region66: #{tpu_custom_call.1} parent=47 // pred_check_branch
          %2623 = sbr.rel (%p2621) target = $region68
        $region67: #{tpu_custom_call.1} parent=47 // pred_region
          %2625 = dma.done [#allocation6], 128
        $region68: #{tpu_custom_call.1} parent=47 // pred_fallthru
          _
      $region48: #{tpu_custom_call.1} parent=5 // pred_fallthru
        _
      %p2626 = scmp.le.s32.totalorder 2, %s14
      // Predicated region
      $region69: #{tpu_custom_call.1} parent=5 // pred_check
        %p2627 = pneg %p2626
      $region70: #{tpu_custom_call.1} parent=5 // pred_check_branch
        %2629 = sbr.rel (%p2627) target = $region72
      $region71: #{tpu_custom_call.1} parent=5 // pred_region
        %s2630 = ssub.s32 %s14, 2
      $region72: #{tpu_custom_call.1} parent=5 // pred_fallthru
        _
    $region6: #{tpu_custom_call.1} parent=1 // loop_footer
      %s18 = sadd.s32 1, %s14
    $region7: #{tpu_custom_call.1} parent=1 // loop_footer_branch
      %13 = sbr.rel target = $region3
    $region8: #{tpu_custom_call.1} parent=1 // loop_exit
      _
    %2631 = vsyncpa [#allocation6], 1
    %s2632 = scalar_lea.sflag [#allocation6], 1
    %2633 = vsyncpa %s2632, 1

</llo_original>
